<compile_context>
chip_gen: v5e
topology: v5e:2x2
jax: 0.10.0
libtpu: 0.0.40
codegen_flags: <defaults>
</compile_context>

<pallas_src>
import functools
import numpy as np
import jax
import jax.numpy as jnp
from jax.experimental import pallas as pl
from jax.experimental.pallas import tpu as pltpu


def _round_up(x, m):
    return (x + m - 1) // m * m


# ----------------------------------------------------------------------------
# Pallas kernel 1: GEMM (bf16 operands, f32 accumulation) + fused bias / ReLU.
# Single-pass full-K variant (used everywhere in this network) and a split-K
# accumulator fallback for very large K.
# ----------------------------------------------------------------------------
def _mm_kernel(x_ref, w_ref, b_ref, o_ref, *, relu):
    y = jnp.dot(x_ref[...], w_ref[...], preferred_element_type=jnp.float32)
    y = y + b_ref[...]
    if relu:
        y = jnp.maximum(y, 0.0)
    o_ref[...] = y.astype(o_ref.dtype)


def _mm_kernel_splitk(x_ref, w_ref, b_ref, o_ref, acc_ref, *, relu):
    @pl.when(pl.program_id(2) == 0)
    def _():
        acc_ref[...] = jnp.zeros_like(acc_ref)

    acc_ref[...] += jnp.dot(x_ref[...], w_ref[...],
                            preferred_element_type=jnp.float32)

    @pl.when(pl.program_id(2) == pl.num_programs(2) - 1)
    def _():
        y = acc_ref[...] + b_ref[...]
        if relu:
            y = jnp.maximum(y, 0.0)
        o_ref[...] = y.astype(o_ref.dtype)


def _matmul_padded(lhs_p, rhs_p, b_p, *, relu, tm, tn, tk, split_k):
    Mp, Kp = lhs_p.shape
    _, Np = rhs_p.shape
    cost = pl.CostEstimate(
        flops=2 * Mp * Np * Kp,
        transcendentals=0,
        bytes_accessed=lhs_p.size * 2 + rhs_p.size * 2 + Mp * Np * 4 + Np * 4)
    if not split_k:
        return pl.pallas_call(
            functools.partial(_mm_kernel, relu=relu),
            out_shape=jax.ShapeDtypeStruct((Mp, Np), jnp.float32),
            grid_spec=pltpu.PrefetchScalarGridSpec(
                num_scalar_prefetch=0,
                grid=(Mp // tm, Np // tn),
                in_specs=[
                    pl.BlockSpec((tm, Kp), lambda i, j: (i, 0)),
                    pl.BlockSpec((Kp, tn), lambda i, j: (0, j)),
                    pl.BlockSpec((1, tn), lambda i, j: (0, j)),
                ],
                out_specs=pl.BlockSpec((tm, tn), lambda i, j: (i, j)),
            ),
            compiler_params=pltpu.CompilerParams(
                dimension_semantics=("parallel", "parallel")),
            cost_estimate=cost,
        )(lhs_p, rhs_p, b_p)
    return pl.pallas_call(
        functools.partial(_mm_kernel_splitk, relu=relu),
        out_shape=jax.ShapeDtypeStruct((Mp, Np), jnp.float32),
        grid_spec=pltpu.PrefetchScalarGridSpec(
            num_scalar_prefetch=0,
            grid=(Mp // tm, Np // tn, Kp // tk),
            in_specs=[
                pl.BlockSpec((tm, tk), lambda i, j, k: (i, k)),
                pl.BlockSpec((tk, tn), lambda i, j, k: (k, j)),
                pl.BlockSpec((1, tn), lambda i, j, k: (0, j)),
            ],
            out_specs=pl.BlockSpec((tm, tn), lambda i, j, k: (i, j)),
            scratch_shapes=[pltpu.VMEM((tm, tn), jnp.float32)],
        ),
        compiler_params=pltpu.CompilerParams(
            dimension_semantics=("parallel", "parallel", "arbitrary")),
        cost_estimate=cost,
    )(lhs_p, rhs_p, b_p)


def pallas_matmul(lhs, rhs, bias=None, relu=False):
    """out = [relu](lhs @ rhs + bias), bf16 operands / f32 accumulation."""
    M, K = lhs.shape
    _, N = rhs.shape

    # M tiling: bigger tiles for the large early-conv GEMMs.
    tm = 512 if M >= 2048 else (256 if M >= 512 else 128)
    Mp = _round_up(M, tm)
    Np = _round_up(N, 128)

    # N tiling: lane-dense; split N when M has only one tile so that both
    # TensorCores get work on megacore parts (v7x).
    i_tiles = Mp // tm
    if i_tiles >= 2:
        if Np <= 512:
            tn = Np
        elif Np % 512 == 0:
            tn = 512
        elif Np % 256 == 0:
            tn = 256
        else:
            tn = 128
    else:
        tn = 128 if Np > 128 else Np

    # K: full-K single pass (no accumulator) covers every layer of this net;
    # pad K only to the bf16 sublane granule (e.g. 27 -> 32), not to 128.
    if K <= 4096:
        Kp = _round_up(K, 16)
        tk, split_k = Kp, False
    else:
        tk, split_k = 512, True
        Kp = _round_up(K, tk)

    lhs_p = lhs.astype(jnp.bfloat16)
    if (Mp, Kp) != (M, K):
        lhs_p = jnp.pad(lhs_p, ((0, Mp - M), (0, Kp - K)))
    rhs_p = rhs.astype(jnp.bfloat16)
    if (Kp, Np) != (K, N):
        rhs_p = jnp.pad(rhs_p, ((0, Kp - K), (0, Np - N)))
    if bias is None:
        bias = jnp.zeros((N,), jnp.float32)
    b_p = bias.astype(jnp.float32)
    if Np != N:
        b_p = jnp.pad(b_p, (0, Np - N))
    b_p = b_p.reshape(1, Np)

    out = _matmul_padded(lhs_p, rhs_p, b_p, relu=relu,
                         tm=tm, tn=tn, tk=tk, split_k=split_k)
    if (Mp, Np) != (M, N):
        out = out[:M, :N]
    return out


# ----------------------------------------------------------------------------
# Pallas kernel 2: 3x3 / stride-1 / pad-1 average pool (count_include_pad).
# The kernel reads the (padded) activation once and sums the 9 shifted windows
# in VMEM — no patch gathering in HBM.
# ----------------------------------------------------------------------------
def _avgpool3x3_s1_kernel(x_ref, o_ref, *, oh, ow):
    o_ref[...] = x_ref[:, 0:oh, 0:ow, :]
    for ki in range(3):
        for kj in range(3):
            if ki == 0 and kj == 0:
                continue
            o_ref[...] += x_ref[:, ki:ki + oh, kj:kj + ow, :]
    o_ref[...] = o_ref[...] * (1.0 / 9.0)


@jax.jit
def pallas_avgpool3x3_s1(x):
    """F.avg_pool2d(x, 3, stride=1, padding=1) on NHWC f32 input."""
    B, H, W, C = x.shape
    xp = jnp.pad(x, ((0, 0), (1, 1), (1, 1), (0, 0)))
    return pl.pallas_call(
        functools.partial(_avgpool3x3_s1_kernel, oh=H, ow=W),
        out_shape=jax.ShapeDtypeStruct((B, H, W, C), jnp.float32),
        grid_spec=pltpu.PrefetchScalarGridSpec(
            num_scalar_prefetch=0,
            grid=(B,),
            in_specs=[pl.BlockSpec((1, H + 2, W + 2, C),
                                   lambda b: (b, 0, 0, 0))],
            out_specs=pl.BlockSpec((1, H, W, C), lambda b: (b, 0, 0, 0)),
        ),
        compiler_params=pltpu.CompilerParams(
            dimension_semantics=("parallel",)),
    )(xp)


# ----------------------------------------------------------------------------
# Pallas kernel 3: global average pool (AdaptiveAvgPool2d((1, 1))).
# ----------------------------------------------------------------------------
def _global_avgpool_kernel(x_ref, o_ref, *, inv_hw):
    o_ref[...] = jnp.sum(x_ref[0], axis=(0, 1), keepdims=True) * inv_hw


@jax.jit
def pallas_global_avgpool(x):
    """AdaptiveAvgPool2d((1,1)) on NHWC input -> (B, 1, 1, C)."""
    B, H, W, C = x.shape
    out = pl.pallas_call(
        functools.partial(_global_avgpool_kernel, inv_hw=1.0 / (H * W)),
        out_shape=jax.ShapeDtypeStruct((B, 1, C), jnp.float32),
        grid_spec=pltpu.PrefetchScalarGridSpec(
            num_scalar_prefetch=0,
            grid=(B,),
            in_specs=[pl.BlockSpec((1, H, W, C), lambda b: (b, 0, 0, 0))],
            out_specs=pl.BlockSpec((1, 1, C), lambda b: (b, 0, 0)),
        ),
        compiler_params=pltpu.CompilerParams(
            dimension_semantics=("parallel",)),
    )(x)
    return out.reshape(B, 1, 1, C)


# ----------------------------------------------------------------------------
# Pallas kernel 4: 3x3 / stride-2 max pool (tap-stack reduction).
# ----------------------------------------------------------------------------
def _maxpool_taps_kernel(p_ref, o_ref):
    o_ref[...] = jnp.max(p_ref[...], axis=0)


@jax.jit
def pallas_maxpool3x3_s2(x):
    """F.max_pool2d(x, 3, stride=2) on NHWC f32 input."""
    B, H, W, C = x.shape
    OH = (H - 3) // 2 + 1
    OW = (W - 3) // 2 + 1
    # TODO(synk): the 9 window taps are still pre-gathered in HBM; an in-kernel
    # strided-window reduction would cut this pool's HBM traffic ~9x.
    cols = [x[:, ki:ki + 2 * OH - 1:2, kj:kj + 2 * OW - 1:2, :]
            for ki in range(3) for kj in range(3)]
    M = B * OH * OW
    patches = jnp.stack(cols, axis=0).reshape(9, M, C).astype(jnp.float32)
    budget = 2 * 1024 * 1024
    tm = max(8, min(1024, (budget // (9 * C * 4)) // 8 * 8))
    tm = min(tm, _round_up(M, 8))
    Mp = _round_up(M, tm)
    if Mp != M:
        patches = jnp.pad(patches, ((0, 0), (0, Mp - M), (0, 0)))
    out = pl.pallas_call(
        _maxpool_taps_kernel,
        out_shape=jax.ShapeDtypeStruct((Mp, C), jnp.float32),
        grid_spec=pltpu.PrefetchScalarGridSpec(
            num_scalar_prefetch=0,
            grid=(Mp // tm,),
            in_specs=[pl.BlockSpec((9, tm, C), lambda i: (0, i, 0))],
            out_specs=pl.BlockSpec((tm, C), lambda i: (i, 0)),
        ),
        compiler_params=pltpu.CompilerParams(
            dimension_semantics=("parallel",)),
    )(patches)
    return out[:M].reshape(B, OH, OW, C)


# ----------------------------------------------------------------------------
# Conv2d (no bias) + BatchNorm2d(eps=1e-3) + ReLU  ==  GEMM with folded params.
# Jitted per layer so the bf16 cast / spatial pad / im2col concat fuse into a
# single XLA pass feeding the Pallas GEMM.
# ----------------------------------------------------------------------------
@functools.partial(jax.jit, static_argnames=("stride", "pad"))
def _conv_bn_relu(x, w, b, *, stride, pad):
    cout, cin, kh, kw = w.shape
    sh, sw = stride
    ph, pw = pad
    x = x.astype(jnp.bfloat16)   # halves activation / im2col HBM traffic
    if ph or pw:
        x = jnp.pad(x, ((0, 0), (ph, ph), (pw, pw), (0, 0)))
    B, H, W, _ = x.shape
    OH = (H - kh) // sh + 1
    OW = (W - kw) // sw + 1
    if kh == 1 and kw == 1 and sh == 1 and sw == 1:
        patches = x
    else:
        # TODO(synk): im2col patches are still materialized in HBM (in bf16);
        # an in-kernel tap-accumulating GEMM would cut conv input traffic a
        # further ~kh*kw x on the early layers.
        cols = [x[:, ki:ki + (OH - 1) * sh + 1:sh,
                  kj:kj + (OW - 1) * sw + 1:sw, :]
                for ki in range(kh) for kj in range(kw)]
        patches = jnp.concatenate(cols, axis=-1)
    lhs = patches.reshape(B * OH * OW, kh * kw * cin)
    rhs = jnp.transpose(w, (2, 3, 1, 0)).reshape(kh * kw * cin, cout)
    out = pallas_matmul(lhs, rhs, bias=b, relu=True)
    return out.reshape(B, OH, OW, cout)


def conv_bn_relu(x, p):
    return _conv_bn_relu(x, p["w"], p["b"], stride=p["stride"], pad=p["pad"])


# ----------------------------------------------------------------------------
# Deterministic synthetic parameters (conv weight + BN stats, then folded).
# ----------------------------------------------------------------------------
class KeyGen:
    def __init__(self, seed=0):
        self.key = jax.random.PRNGKey(seed)
        self.i = 0

    def __call__(self):
        self.i += 1
        return jax.random.fold_in(self.key, self.i)


def basic_conv_params(kg, cin, cout, ksize, stride=1, padding=0):
    kh, kw = (ksize, ksize) if isinstance(ksize, int) else ksize
    sh, sw = (stride, stride) if isinstance(stride, int) else stride
    ph, pw = (padding, padding) if isinstance(padding, int) else padding
    ks = jax.random.split(kg(), 5)
    w = jax.random.normal(ks[0], (cout, cin, kh, kw), jnp.float32)
    w = w / np.sqrt(cin * kh * kw)
    gamma = 1.0 + 0.1 * jax.random.normal(ks[1], (cout,), jnp.float32)
    beta = 0.1 * jax.random.normal(ks[2], (cout,), jnp.float32)
    mean = 0.1 * jax.random.normal(ks[3], (cout,), jnp.float32)
    var = jnp.abs(1.0 + 0.1 * jax.random.normal(ks[4], (cout,), jnp.float32))
    scale = gamma / jnp.sqrt(var + 1e-3)          # BN eps = 0.001
    return {"w": w * scale[:, None, None, None],
            "b": beta - mean * scale,
            "stride": (sh, sw), "pad": (ph, pw)}


def inception_a_params(kg, cin, pool_features):
    return {
        "b1x1": basic_conv_params(kg, cin, 64, 1),
        "b5x5_1": basic_conv_params(kg, cin, 48, 1),
        "b5x5_2": basic_conv_params(kg, 48, 64, 5, padding=2),
        "b3dbl_1": basic_conv_params(kg, cin, 64, 1),
        "b3dbl_2": basic_conv_params(kg, 64, 96, 3, padding=1),
        "b3dbl_3": basic_conv_params(kg, 96, 96, 3, padding=1),
        "bpool": basic_conv_params(kg, cin, pool_features, 1),
    }


def inception_b_params(kg, cin):
    return {
        "b3x3": basic_conv_params(kg, cin, 384, 3, stride=2),
        "b3dbl_1": basic_conv_params(kg, cin, 64, 1),
        "b3dbl_2": basic_conv_params(kg, 64, 96, 3, padding=1),
        "b3dbl_3": basic_conv_params(kg, 96, 96, 3, stride=2),
    }


def inception_c_params(kg, cin, c7):
    return {
        "b1x1": basic_conv_params(kg, cin, 192, 1),
        "b7_1": basic_conv_params(kg, cin, c7, 1),
        "b7_2": basic_conv_params(kg, c7, c7, (1, 7), padding=(0, 3)),
        "b7_3": basic_conv_params(kg, c7, 192, (7, 1), padding=(3, 0)),
        "b7d_1": basic_conv_params(kg, cin, c7, 1),
        "b7d_2": basic_conv_params(kg, c7, c7, (7, 1), padding=(3, 0)),
        "b7d_3": basic_conv_params(kg, c7, c7, (1, 7), padding=(0, 3)),
        "b7d_4": basic_conv_params(kg, c7, c7, (7, 1), padding=(3, 0)),
        "b7d_5": basic_conv_params(kg, c7, 192, (1, 7), padding=(0, 3)),
        "bpool": basic_conv_params(kg, cin, 192, 1),
    }


def inception_d_params(kg, cin):
    return {
        "b3_1": basic_conv_params(kg, cin, 192, 1),
        "b3_2": basic_conv_params(kg, 192, 320, 3, stride=2),
        "b7x3_1": basic_conv_params(kg, cin, 192, 1),
        "b7x3_2": basic_conv_params(kg, 192, 192, (1, 7), padding=(0, 3)),
        "b7x3_3": basic_conv_params(kg, 192, 192, (7, 1), padding=(3, 0)),
        "b7x3_4": basic_conv_params(kg, 192, 192, 3, stride=2),
    }


def inception_e_params(kg, cin):
    return {
        "b1x1": basic_conv_params(kg, cin, 320, 1),
        "b3_1": basic_conv_params(kg, cin, 384, 1),
        "b3_2a": basic_conv_params(kg, 384, 384, (1, 3), padding=(0, 1)),
        "b3_2b": basic_conv_params(kg, 384, 384, (3, 1), padding=(1, 0)),
        "b3d_1": basic_conv_params(kg, cin, 448, 1),
        "b3d_2": basic_conv_params(kg, 448, 384, 3, padding=1),
        "b3d_3a": basic_conv_params(kg, 384, 384, (1, 3), padding=(0, 1)),
        "b3d_3b": basic_conv_params(kg, 384, 384, (3, 1), padding=(1, 0)),
        "bpool": basic_conv_params(kg, cin, 192, 1),
    }


# ----------------------------------------------------------------------------
# Mixed blocks (apply).
# ----------------------------------------------------------------------------
def inception_a(p, x):
    b1 = conv_bn_relu(x, p["b1x1"])
    b5 = conv_bn_relu(conv_bn_relu(x, p["b5x5_1"]), p["b5x5_2"])
    b3 = conv_bn_relu(x, p["b3dbl_1"])
    b3 = conv_bn_relu(conv_bn_relu(b3, p["b3dbl_2"]), p["b3dbl_3"])
    bp = conv_bn_relu(pallas_avgpool3x3_s1(x), p["bpool"])
    return jnp.concatenate([b1, b5, b3, bp], axis=-1)


def inception_b(p, x):
    b3 = conv_bn_relu(x, p["b3x3"])
    bd = conv_bn_relu(x, p["b3dbl_1"])
    bd = conv_bn_relu(conv_bn_relu(bd, p["b3dbl_2"]), p["b3dbl_3"])
    bp = pallas_maxpool3x3_s2(x)
    return jnp.concatenate([b3, bd, bp], axis=-1)


def inception_c(p, x):
    b1 = conv_bn_relu(x, p["b1x1"])
    b7 = conv_bn_relu(x, p["b7_1"])
    b7 = conv_bn_relu(conv_bn_relu(b7, p["b7_2"]), p["b7_3"])
    bd = conv_bn_relu(x, p["b7d_1"])
    bd = conv_bn_relu(bd, p["b7d_2"])
    bd = conv_bn_relu(bd, p["b7d_3"])
    bd = conv_bn_relu(bd, p["b7d_4"])
    bd = conv_bn_relu(bd, p["b7d_5"])
    bp = conv_bn_relu(pallas_avgpool3x3_s1(x), p["bpool"])
    return jnp.concatenate([b1, b7, bd, bp], axis=-1)


def inception_d(p, x):
    b3 = conv_bn_relu(conv_bn_relu(x, p["b3_1"]), p["b3_2"])
    b7 = conv_bn_relu(x, p["b7x3_1"])
    b7 = conv_bn_relu(b7, p["b7x3_2"])
    b7 = conv_bn_relu(b7, p["b7x3_3"])
    b7 = conv_bn_relu(b7, p["b7x3_4"])
    bp = pallas_maxpool3x3_s2(x)
    return jnp.concatenate([b3, b7, bp], axis=-1)


def inception_e(p, x):
    b1 = conv_bn_relu(x, p["b1x1"])
    b3 = conv_bn_relu(x, p["b3_1"])
    b3 = jnp.concatenate([conv_bn_relu(b3, p["b3_2a"]),
                          conv_bn_relu(b3, p["b3_2b"])], axis=-1)
    bd = conv_bn_relu(conv_bn_relu(x, p["b3d_1"]), p["b3d_2"])
    bd = jnp.concatenate([conv_bn_relu(bd, p["b3d_3a"]),
                          conv_bn_relu(bd, p["b3d_3b"])], axis=-1)
    bp = conv_bn_relu(pallas_avgpool3x3_s1(x), p["bpool"])
    return jnp.concatenate([b1, b3, bd, bp], axis=-1)


# ----------------------------------------------------------------------------
# Bilinear resize to 299x299 (align_corners=False, upsample) as Pallas GEMMs,
# with the "2*x - 1" normalization folded into the second GEMM (scale/bias).
# ----------------------------------------------------------------------------
def _bilinear_matrix(out_size, in_size):
    Wm = np.zeros((out_size, in_size), np.float32)
    scale = in_size / out_size
    for o in range(out_size):
        src = max((o + 0.5) * scale - 0.5, 0.0)
        i0 = min(int(np.floor(src)), in_size - 1)
        i1 = min(i0 + 1, in_size - 1)
        t = src - i0
        Wm[o, i0] += 1.0 - t
        Wm[o, i1] += t
    return Wm


@functools.partial(jax.jit, static_argnames=("out_h", "out_w", "normalize"))
def resize_and_normalize(x_nchw, *, out_h, out_w, normalize):
    B, C, H, W = x_nchw.shape
    Ww = jnp.asarray(_bilinear_matrix(out_w, W))   # (out_w, W)
    Wh = jnp.asarray(_bilinear_matrix(out_h, H))   # (out_h, H)
    xw = pallas_matmul(x_nchw.reshape(B * C * H, W), Ww.T)        # width interp
    xw = xw.reshape(B, C, H, out_w)
    xh = jnp.transpose(xw, (0, 1, 3, 2)).reshape(B * C * out_w, H)
    scale = 2.0 if normalize else 1.0
    bias = jnp.full((out_h,), -1.0 if normalize else 0.0, jnp.float32)
    y = pallas_matmul(xh, scale * Wh.T, bias=bias)                # height interp
    y = y.reshape(B, C, out_w, out_h)
    return jnp.transpose(y, (0, 1, 3, 2))          # (B, C, out_h, out_w)


# ----------------------------------------------------------------------------
# Full model.
# ----------------------------------------------------------------------------
def build_params(kg, last_needed_block):
    P = {}
    P["Conv2d_1a_3x3"] = basic_conv_params(kg, 3, 32, 3, stride=2)
    P["Conv2d_2a_3x3"] = basic_conv_params(kg, 32, 32, 3)
    P["Conv2d_2b_3x3"] = basic_conv_params(kg, 32, 64, 3, padding=1)
    if last_needed_block >= 1:
        P["Conv2d_3b_1x1"] = basic_conv_params(kg, 64, 80, 1)
        P["Conv2d_4a_3x3"] = basic_conv_params(kg, 80, 192, 3)
    if last_needed_block >= 2:
        P["Mixed_5b"] = inception_a_params(kg, 192, 32)
        P["Mixed_5c"] = inception_a_params(kg, 256, 64)
        P["Mixed_5d"] = inception_a_params(kg, 288, 64)
        P["Mixed_6a"] = inception_b_params(kg, 288)
        P["Mixed_6b"] = inception_c_params(kg, 768, 128)
        P["Mixed_6c"] = inception_c_params(kg, 768, 160)
        P["Mixed_6d"] = inception_c_params(kg, 768, 160)
        P["Mixed_6e"] = inception_c_params(kg, 768, 192)
    if last_needed_block >= 3:
        P["Mixed_7a"] = inception_d_params(kg, 768)
        P["Mixed_7b"] = inception_e_params(kg, 1280)
        P["Mixed_7c"] = inception_e_params(kg, 2048)
    return P


class InceptionV3Pallas:
    DEFAULT_BLOCK_INDEX = 3
    BLOCK_INDEX_BY_DIM = {64: 0, 192: 1, 768: 2, 2048: 3}

    def __init__(self, output_blocks=(DEFAULT_BLOCK_INDEX,), resize_input=True,
                 normalize_input=True, seed=0):
        self.resize_input = resize_input
        self.normalize_input = normalize_input
        self.output_blocks = sorted(output_blocks)
        self.last_needed_block = max(output_blocks)
        assert self.last_needed_block <= 3, "Last possible output block index is 3"
        # TODO(synk): synthetic deterministic weights stand in for the
        # torchvision pretrained checkpoint (no .pt loading by design).
        self.params = build_params(KeyGen(seed), self.last_needed_block)

    def __call__(self, inp):
        outp = []
        x = inp.astype(jnp.float32)
        if self.resize_input:
            x = resize_and_normalize(x, out_h=299, out_w=299,
                                     normalize=self.normalize_input)
        elif self.normalize_input:
            x = 2.0 * x - 1.0
        x = jnp.transpose(x, (0, 2, 3, 1))  # NCHW -> NHWC (internal layout)
        P = self.params
        # block 0
        x = conv_bn_relu(x, P["Conv2d_1a_3x3"])
        x = conv_bn_relu(x, P["Conv2d_2a_3x3"])
        x = conv_bn_relu(x, P["Conv2d_2b_3x3"])
        x = pallas_maxpool3x3_s2(x)
        if 0 in self.output_blocks:
            outp.append(jnp.transpose(x, (0, 3, 1, 2)))
        # block 1
        if self.last_needed_block >= 1:
            x = conv_bn_relu(x, P["Conv2d_3b_1x1"])
            x = conv_bn_relu(x, P["Conv2d_4a_3x3"])
            x = pallas_maxpool3x3_s2(x)
            if 1 in self.output_blocks:
                outp.append(jnp.transpose(x, (0, 3, 1, 2)))
        # block 2
        if self.last_needed_block >= 2:
            x = inception_a(P["Mixed_5b"], x)
            x = inception_a(P["Mixed_5c"], x)
            x = inception_a(P["Mixed_5d"], x)
            x = inception_b(P["Mixed_6a"], x)
            x = inception_c(P["Mixed_6b"], x)
            x = inception_c(P["Mixed_6c"], x)
            x = inception_c(P["Mixed_6d"], x)
            x = inception_c(P["Mixed_6e"], x)
            if 2 in self.output_blocks:
                outp.append(jnp.transpose(x, (0, 3, 1, 2)))
        # block 3
        if self.last_needed_block >= 3:
            x = inception_d(P["Mixed_7a"], x)
            x = inception_e(P["Mixed_7b"], x)
            x = inception_e(P["Mixed_7c"], x)
            x = pallas_global_avgpool(x)        # AdaptiveAvgPool2d((1, 1))
            if 3 in self.output_blocks:
                outp.append(jnp.transpose(x, (0, 3, 1, 2)))
        return outp


if __name__ == "__main__":
    key = jax.random.PRNGKey(0)
    # Input: Bx3xHxW, values in (0, 1) — small spatial; forward resizes to 299.
    x = jax.random.uniform(key, (2, 3, 16, 16), dtype=jnp.float32)

    model = InceptionV3Pallas(output_blocks=(3,), resize_input=True,
                              normalize_input=True, seed=0)
    outs = model(x)
    outs = jax.block_until_ready(outs)

    assert len(outs) == 1
    assert outs[0].shape == (2, 2048, 1, 1), outs[0].shape
    assert bool(jnp.all(jnp.isfinite(outs[0])))
    print("KERNEL_OK")
</pallas_src>

<mosaic_0001>
module attributes {stable_mosaic.version = 11 : i64} {
  func.func @_mm_kernel(%arg0: i32, %arg1: i32, %arg2: memref<128x16xbf16, #tpu.memory_space<vmem>>, %arg3: memref<16x128xbf16, #tpu.memory_space<vmem>>, %arg4: memref<1x128xf32, #tpu.memory_space<vmem>>, %arg5: memref<128x128xf32, #tpu.memory_space<vmem>>) attributes {dimension_semantics = [#tpu.dimension_semantics<parallel>, #tpu.dimension_semantics<parallel>], iteration_bounds = array<i64: 1, 3>, scalar_prefetch = 0 : i64, scratch_operands = 0 : i64, tpu.core_type = #tpu.core_type<tc>, window_params = [{transform_indices = @transform_0, window_bounds = array<i64: 128, 16>}, {transform_indices = @transform_1, window_bounds = array<i64: 16, 128>}, {transform_indices = @transform_2, window_bounds = array<i64: 1, 128>}, {transform_indices = @transform_3, window_bounds = array<i64: 128, 128>}]} {
    %c0 = arith.constant 0 : index
    %c0_0 = arith.constant 0 : index
    %0 = vector.load %arg2[%c0, %c0_0] : memref<128x16xbf16, #tpu.memory_space<vmem>>, vector<128x16xbf16>
    %c0_1 = arith.constant 0 : index
    %c0_2 = arith.constant 0 : index
    %1 = vector.load %arg3[%c0_1, %c0_2] : memref<16x128xbf16, #tpu.memory_space<vmem>>, vector<16x128xbf16>
    %cst = arith.constant dense<0.000000e+00> : vector<128x128xf32>
    %2 = tpu.matmul %0, %1, %cst {dimension_numbers = #tpu.dot_dimension_numbers<[1], [0], [0], [1], [0, 0, 1, 1], [], []>} : vector<128x16xbf16>, vector<16x128xbf16>, vector<128x128xf32> -> vector<128x128xf32>
    %c0_3 = arith.constant 0 : index
    %c0_4 = arith.constant 0 : index
    %3 = vector.load %arg4[%c0_3, %c0_4] : memref<1x128xf32, #tpu.memory_space<vmem>>, vector<1x128xf32>
    %4 = vector.broadcast %3 : vector<1x128xf32> to vector<128x128xf32>
    %5 = arith.addf %2, %4 : vector<128x128xf32>
    %c0_5 = arith.constant 0 : index
    %c0_6 = arith.constant 0 : index
    %6 = vector.load %arg5[%c0_5, %c0_6] : memref<128x128xf32, #tpu.memory_space<vmem>>, vector<128x128xf32>
    tpu.vector_store %arg5[%c0_5, %c0_6], %5 {strides = array<i32>} : memref<128x128xf32, #tpu.memory_space<vmem>>, vector<128x128xf32>,
    return
  }
  func.func @transform_0(%arg0: i32, %arg1: i32) -> (i32, i32) {
    %c0_i32 = arith.constant 0 : i32
    %c0_i32_0 = arith.constant 0 : i32
    return %arg0, %c0_i32 : i32, i32
  }
  func.func @transform_1(%arg0: i32, %arg1: i32) -> (i32, i32) {
    %c0_i32 = arith.constant 0 : i32
    %c0_i32_0 = arith.constant 0 : i32
    return %c0_i32, %arg1 : i32, i32
  }
  func.func @transform_2(%arg0: i32, %arg1: i32) -> (i32, i32) {
    %c0_i32 = arith.constant 0 : i32
    %c0_i32_0 = arith.constant 0 : i32
    return %c0_i32, %arg1 : i32, i32
  }
  func.func @transform_3(%arg0: i32, %arg1: i32) -> (i32, i32) {
    %c0_i32 = arith.constant 0 : i32
    return %arg0, %arg1 : i32, i32
  }
}

module attributes {stable_mosaic.version = 11 : i64} {
  func.func @_mm_kernel(%arg0: i32, %arg1: i32, %arg2: memref<256x16xbf16, #tpu.memory_space<vmem>>, %arg3: memref<16x384xbf16, #tpu.memory_space<vmem>>, %arg4: memref<1x384xf32, #tpu.memory_space<vmem>>, %arg5: memref<256x384xf32, #tpu.memory_space<vmem>>) attributes {dimension_semantics = [#tpu.dimension_semantics<parallel>, #tpu.dimension_semantics<parallel>], iteration_bounds = array<i64: 8, 1>, scalar_prefetch = 0 : i64, scratch_operands = 0 : i64, tpu.core_type = #tpu.core_type<tc>, window_params = [{transform_indices = @transform_0, window_bounds = array<i64: 256, 16>}, {transform_indices = @transform_1, window_bounds = array<i64: 16, 384>}, {transform_indices = @transform_2, window_bounds = array<i64: 1, 384>}, {transform_indices = @transform_3, window_bounds = array<i64: 256, 384>}]} {
    %c0 = arith.constant 0 : index
    %c0_0 = arith.constant 0 : index
    %0 = vector.load %arg2[%c0, %c0_0] : memref<256x16xbf16, #tpu.memory_space<vmem>>, vector<256x16xbf16>
    %c0_1 = arith.constant 0 : index
    %c0_2 = arith.constant 0 : index
    %1 = vector.load %arg3[%c0_1, %c0_2] : memref<16x384xbf16, #tpu.memory_space<vmem>>, vector<16x384xbf16>
    %cst = arith.constant dense<0.000000e+00> : vector<256x384xf32>
    %2 = tpu.matmul %0, %1, %cst {dimension_numbers = #tpu.dot_dimension_numbers<[1], [0], [0], [1], [0, 0, 1, 1], [], []>} : vector<256x16xbf16>, vector<16x384xbf16>, vector<256x384xf32> -> vector<256x384xf32>
    %c0_3 = arith.constant 0 : index
    %c0_4 = arith.constant 0 : index
    %3 = vector.load %arg4[%c0_3, %c0_4] : memref<1x384xf32, #tpu.memory_space<vmem>>, vector<1x384xf32>
    %4 = vector.broadcast %3 : vector<1x384xf32> to vector<256x384xf32>
    %5 = arith.addf %2, %4 : vector<256x384xf32>
    %c0_5 = arith.constant 0 : index
    %c0_6 = arith.constant 0 : index
    %6 = vector.load %arg5[%c0_5, %c0_6] : memref<256x384xf32, #tpu.memory_space<vmem>>, vector<256x384xf32>
    tpu.vector_store %arg5[%c0_5, %c0_6], %5 {strides = array<i32>} : memref<256x384xf32, #tpu.memory_space<vmem>>, vector<256x384xf32>,
    return
  }
  func.func @transform_0(%arg0: i32, %arg1: i32) -> (i32, i32) {
    %c0_i32 = arith.constant 0 : i32
    %c0_i32_0 = arith.constant 0 : i32
    return %arg0, %c0_i32 : i32, i32
  }
  func.func @transform_1(%arg0: i32, %arg1: i32) -> (i32, i32) {
    %c0_i32 = arith.constant 0 : i32
    %c0_i32_0 = arith.constant 0 : i32
    return %c0_i32, %arg1 : i32, i32
  }
  func.func @transform_2(%arg0: i32, %arg1: i32) -> (i32, i32) {
    %c0_i32 = arith.constant 0 : i32
    %c0_i32_0 = arith.constant 0 : i32
    return %c0_i32, %arg1 : i32, i32
  }
  func.func @transform_3(%arg0: i32, %arg1: i32) -> (i32, i32) {
    %c0_i32 = arith.constant 0 : i32
    return %arg0, %arg1 : i32, i32
  }
}

</mosaic_0001>

<llo_original>
// kernel: resize_and_normalize.2
$region0: #{resize_and_normalize.2}
  #allocation0 [shape = 'u32[]', space=smem, size = 0x4, offset = 0x4, fixed_abs, tag = 'smem constant byte address 0x4 - core index']
  #allocation1 [shape = 'u32[72,128]{1,0:T(1,128)}', space=vmem, size = 0x9000, scoped, tag = 'internal scratch']
  %s0 = inlined_call_operand.vmem [shape: bf16[128,16], index: 0, kind: input, shape index: {}]
  %s1 = inlined_call_operand.hbm [shape: bf16[16,384], index: 1, kind: input, shape index: {}]
  %s2 = inlined_call_operand.vmem [shape: f32[1,384], index: 2, kind: input, shape index: {}]
  %s3 = inlined_call_operand.vmem [shape: f32[128,384], index: 3, kind: output, shape index: {}]
  %s4 = sld [smem:[#allocation0]]
  $region83: #{resize_and_normalize.2} parent=0
    _
  %s6 = ssub.s32 1, %s4
  %s7 = scalar_select 0, %s6, %s4
  $region1: #{resize_and_normalize.2} parent=0
    #allocation2 [shape = 'u8[8192]{0}', space=vmem, size = 0x2000, scoped, tag = 'input window, operand 1']
    #allocation3 [shape = 's32[2]{0}', space=sflag, size = 0x8, scoped, tag = 'scoped memory for resize_and_normalize.2']
    #allocation4 [shape = 'u8[131072]{0}', space=vmem, size = 0x20000, scoped, tag = 'output window, operand 0']
    %8 = vsyncpa [#allocation3], 0
    %s9 = scalar_lea.sflag [#allocation3], 1
    %10 = vsyncpa %s9, 0
    loop: start=0, step=1, limit=5
    $region2: #{resize_and_normalize.2} parent=1 // loop_pre_header
      _
    $region3: #{resize_and_normalize.2} parent=1 // loop_header
      %s12 = sphi 0, %s16
      %p13 = scmp.ge.s32.totalorder %s12, 5
      %s19 = sphi 0, %s31
      %s20 = sphi 0, %s27
      %s21 = sphi 0, %s19
      %s22 = sphi 0, %s20
      %s23 = sphi 0, %s21
      %s24 = sphi 0, %s22
      %s34 = sphi 0, %s36
      %s37 = sphi 0, %s34
      %s38 = sphi 0, %s37
      %s54 = sphi 0, %s38
      %s60 = sphi 0, %s62
      %s63 = sphi 0, %s60
      %s64 = sphi 0, %s63
      %s80 = sphi 0, %s64
      %s86 = sphi 0, %s88
      %s89 = sphi 0, %s86
      %s90 = sphi 0, %s89
      %s106 = sphi 0, %s90
      %s114 = sphi 0, %s116
      %s117 = sphi 0, %s114
      %s118 = sphi 0, %s117
      %s134 = sphi 0, %s118
    $region4: #{resize_and_normalize.2} parent=1 // loop_header_branch
      %15 = sbr.rel (%p13) target = $region8
    $region5: #{resize_and_normalize.2} parent=1 // loop_body
      %s17 = ssub.s32 %s12, 1
      %s18 = ssub.s32 %s12, 2
      %s25 = sadd.s32 1, %s20
      %p26 = scmp.ge.s32.totalorder %s25, 3
      %s27 = scalar_select %p26, 0, %s25
      %s28 = sadd.s32 1, %s19
      %s29 = scalar_select %p26, %s28, %s19
      %p30 = scmp.ge.s32.totalorder %s29, 1
      %s31 = scalar_select %p30, 0, %s29
      %s32 = ssub.s32 %s19, %s31
      %p33 = scmp.eq.s32.totalorder %s32, 0
      %s35 = sadd.s32 %s34, 1
      %s36 = scalar_select %p33, %s34, %s35
      %p39 = pneg %p33
      %p40 = scmp.eq.s32.totalorder %s12, 2
      %p41 = por %p39, %p40
      %p42 = scmp.ne.s32.totalorder %s34, %s37
      %p43 = scmp.eq.s32.totalorder %s12, 0
      %p44 = por %p42, %p43
      %p45 = scmp.ne.s32.totalorder %s34, %s37
      %p46 = scmp.eq.s32.totalorder %s17, 2
      %p47 = por %p45, %p46
      %p48 = scmp.ne.s32.totalorder %s37, %s38
      %p49 = scmp.eq.s32.totalorder %s17, 0
      %p50 = por %p48, %p49
      %p51 = scmp.ne.s32.totalorder %s37, %s38
      %p52 = scmp.eq.s32.totalorder %s18, 2
      %p53 = por %p51, %p52
      %p55 = scmp.ne.s32.totalorder %s38, %s54
      %p56 = scmp.eq.s32.totalorder %s18, 0
      %p57 = por %p55, %p56
      %s58 = ssub.s32 %s20, %s27
      %p59 = scmp.eq.s32.totalorder %s58, 0
      %s61 = sadd.s32 %s60, 1
      %s62 = scalar_select %p59, %s60, %s61
      %p65 = pneg %p59
      %p66 = scmp.eq.s32.totalorder %s12, 2
      %p67 = por %p65, %p66
      %p68 = scmp.ne.s32.totalorder %s60, %s63
      %p69 = scmp.eq.s32.totalorder %s12, 0
      %p70 = por %p68, %p69
      %p71 = scmp.ne.s32.totalorder %s60, %s63
      %p72 = scmp.eq.s32.totalorder %s17, 2
      %p73 = por %p71, %p72
      %p74 = scmp.ne.s32.totalorder %s63, %s64
      %p75 = scmp.eq.s32.totalorder %s17, 0
      %p76 = por %p74, %p75
      %p77 = scmp.ne.s32.totalorder %s63, %s64
      %p78 = scmp.eq.s32.totalorder %s18, 2
      %p79 = por %p77, %p78
      %p81 = scmp.ne.s32.totalorder %s64, %s80
      %p82 = scmp.eq.s32.totalorder %s18, 0
      %p83 = por %p81, %p82
      %s84 = ssub.s32 %s20, %s27
      %p85 = scmp.eq.s32.totalorder %s84, 0
      %s87 = sadd.s32 %s86, 1
      %s88 = scalar_select %p85, %s86, %s87
      %p91 = pneg %p85
      %p92 = scmp.eq.s32.totalorder %s12, 2
      %p93 = por %p91, %p92
      %p94 = scmp.ne.s32.totalorder %s86, %s89
      %p95 = scmp.eq.s32.totalorder %s12, 0
      %p96 = por %p94, %p95
      %p97 = scmp.ne.s32.totalorder %s86, %s89
      %p98 = scmp.eq.s32.totalorder %s17, 2
      %p99 = por %p97, %p98
      %p100 = scmp.ne.s32.totalorder %s89, %s90
      %p101 = scmp.eq.s32.totalorder %s17, 0
      %p102 = por %p100, %p101
      %p103 = scmp.ne.s32.totalorder %s89, %s90
      %p104 = scmp.eq.s32.totalorder %s18, 2
      %p105 = por %p103, %p104
      %p107 = scmp.ne.s32.totalorder %s90, %s106
      %p108 = scmp.eq.s32.totalorder %s18, 0
      %p109 = por %p107, %p108
      %s110 = ssub.s32 %s19, %s31
      %s111 = ssub.s32 %s20, %s27
      %s112 = sor.u32 %s110, %s111
      %p113 = scmp.eq.s32.totalorder %s112, 0
      %s115 = sadd.s32 %s114, 1
      %s116 = scalar_select %p113, %s114, %s115
      %p119 = pneg %p113
      %p120 = scmp.eq.s32.totalorder %s12, 2
      %p121 = por %p119, %p120
      %p122 = scmp.ne.s32.totalorder %s114, %s117
      %p123 = scmp.eq.s32.totalorder %s12, 0
      %p124 = por %p122, %p123
      %p125 = scmp.ne.s32.totalorder %s114, %s117
      %p126 = scmp.eq.s32.totalorder %s17, 2
      %p127 = por %p125, %p126
      %p128 = scmp.ne.s32.totalorder %s117, %s118
      %p129 = scmp.eq.s32.totalorder %s17, 0
      %p130 = por %p128, %p129
      %p131 = scmp.ne.s32.totalorder %s117, %s118
      %p132 = scmp.eq.s32.totalorder %s18, 2
      %p133 = por %p131, %p132
      %p135 = scmp.ne.s32.totalorder %s118, %s134
      %p136 = scmp.eq.s32.totalorder %s18, 0
      %p137 = por %p135, %p136
      %p138 = scmp.le.s32.totalorder 1, %s12
      %p139 = scmp.lt.s32.totalorder %s12, 4
      %p140 = pnand %p138, %p139
      %p141 = pneg %p140
      // Predicated region
      $region9: #{resize_and_normalize.2} parent=5 // pred_check
        _
      $region10: #{resize_and_normalize.2} parent=5 // pred_check_branch
        %143 = sbr.rel (%p140) target = $region12
      $region11: #{resize_and_normalize.2} parent=5 // pred_region
        %s144 = ssub.s32 %s12, 1
        // Predicated region
        $region13: #{resize_and_normalize.2} parent=11 // pred_check
          %p145 = pneg %p50
        $region14: #{resize_and_normalize.2} parent=11 // pred_check_branch
          %147 = sbr.rel (%p145) target = $region16
        $region15: #{resize_and_normalize.2} parent=11 // pred_region
          %s148 = smul.u32 16, %s21
          %p149 = scmp.lt.s32.totalorder %s148, 15
          %s150 = scalar_select %p149, %s148, 15
          %s151 = smul.addr %s150, 4
          %s152 = scalar_lea.vmem %s0, %s151
          %s153 = smul.u32 16, %s21
        $region16: #{resize_and_normalize.2} parent=11 // pred_fallthru
          _
      $region12: #{resize_and_normalize.2} parent=5 // pred_fallthru
        _
      %p154 = scmp.lt.s32.totalorder %s12, 3
      // Predicated region
      $region17: #{resize_and_normalize.2} parent=5 // pred_check
        %p155 = pneg %p154
      $region18: #{resize_and_normalize.2} parent=5 // pred_check_branch
        %157 = sbr.rel (%p155) target = $region20
      $region19: #{resize_and_normalize.2} parent=5 // pred_region
        // Predicated region
        $region21: #{resize_and_normalize.2} parent=19 // pred_check
          %p158 = pneg %p70
        $region22: #{resize_and_normalize.2} parent=19 // pred_check_branch
          %160 = sbr.rel (%p158) target = $region24
        $region23: #{resize_and_normalize.2} parent=19 // pred_region
          %s161 = sand.u32 %s60, 1
          %s162 = scalar_lea.sflag [#allocation3], %s161
          %s163 = sand.u32 %s60, 1
          %s164 = smul.addr %s163, 8
          %s165 = scalar_lea.vmem [#allocation2], %s164
          %167 = vsyncadd %s162, 0
          %s168 = smul.addr %s20, 4
          %s169 = scalar_lea.hbm %s1, %s168
          %s170 = sshll.u32 %s169, 4
          %s171 = int_to_ptr.hbm [resolvable:$true] %s170
          %s172 = sshll.u32 %s165, 4
          %s173 = int_to_ptr.vmem [resolvable:$true] %s172
          %178 = dma.hbm_to_vmem [thread:$0]  %s171, 128, %s173, %s162, 192, 64, 4
        $region24: #{resize_and_normalize.2} parent=19 // pred_fallthru
          _
        // Predicated region
        $region25: #{resize_and_normalize.2} parent=19 // pred_check
          %p179 = pneg %p96
        $region26: #{resize_and_normalize.2} parent=19 // pred_check_branch
          %181 = sbr.rel (%p179) target = $region28
        $region27: #{resize_and_normalize.2} parent=19 // pred_region
          %p182 = scmp.lt.s32.totalorder %s20, 2
          %s183 = scalar_select %p182, %s20, 2
          %s184 = scalar_lea.vmem %s2, %s183
        $region28: #{resize_and_normalize.2} parent=19 // pred_fallthru
          _
      $region20: #{resize_and_normalize.2} parent=5 // pred_fallthru
        _
      %p185 = scmp.le.s32.totalorder 1, %s12
      %p186 = scmp.lt.s32.totalorder %s12, 4
      %p187 = pnand %p185, %p186
      %p188 = pneg %p187
      // Predicated region
      $region29: #{resize_and_normalize.2} parent=5 // pred_check
        _
      $region30: #{resize_and_normalize.2} parent=5 // pred_check_branch
        %190 = sbr.rel (%p187) target = $region32
      $region31: #{resize_and_normalize.2} parent=5 // pred_region
        %s191 = ssub.s32 %s12, 1
        %s192 = sand.u32 %s63, 1
        %s193 = scalar_lea.sflag [#allocation3], %s192
        %s194 = sand.u32 %s63, 1
        %s195 = smul.addr %s194, 8
        %s196 = scalar_lea.vmem [#allocation2], %s195
        // Predicated region
        $region33: #{resize_and_normalize.2} parent=31 // pred_check
          %p197 = pneg %p76
        $region34: #{resize_and_normalize.2} parent=31 // pred_check_branch
          %199 = sbr.rel (%p197) target = $region36
        $region35: #{resize_and_normalize.2} parent=31 // pred_region
          %201 = dma.done %s193, 128
        $region36: #{resize_and_normalize.2} parent=31 // pred_fallthru
          _
        %s202 = smul.u32 16, %s21
        %p203 = scmp.lt.s32.totalorder %s202, 15
        %s204 = scalar_select %p203, %s202, 15
        %s205 = smul.addr %s204, 4
        %s206 = scalar_lea.vmem %s0, %s205
        %p207 = pneg %p50
        %p208 = pneg %p47
        %s209 = sand.u32 %s63, 1
        %s210 = scalar_lea.sflag [#allocation3], %s209
        %s211 = sand.u32 %s63, 1
        %s212 = smul.addr %s211, 8
        %s213 = scalar_lea.vmem [#allocation2], %s212
        %p214 = pneg %p76
        %p215 = pneg %p73
        %p216 = scmp.lt.s32.totalorder %s22, 2
        %s217 = scalar_select %p216, %s22, 2
        %s218 = scalar_lea.vmem %s2, %s217
        %p219 = pneg %p102
        %p220 = pneg %p99
        %p221 = pneg %p130
        %p222 = pneg %p127
        %s223 = sand.u32 %s117, 1
        %s224 = sand.u32 %s117, 1
        %s225 = smul.addr %s224, 128
        %s226 = scalar_lea.vmem [#allocation4], %s225
        %s227 = smul.u32 16, %s21
        %p228 = scmp.lt.s32.totalorder %s227, 15
        %s229 = scalar_select %p228, %s227, 15
        %s230 = smul.addr %s229, 4
        %s231 = scalar_lea.vmem %s0, %s230
        %s232 = smul.u32 16, %s21
        %p233 = scmp.lt.s32.totalorder %s22, 2
        %s234 = scalar_select %p233, %s22, 2
        %s235 = scalar_lea.vmem %s2, %s234
        %s236 = smul.u32 16, %s21
        %v238 = vld [vmem:[%s231] sm:$0xf]
        %v239 = vld [vmem:[%s231 + $0x4] sm:$0xf]
        %v240 = vld [vmem:[%s231 + $0x8] sm:$0xf]
        %v241 = vld [vmem:[%s231 + $0xc] sm:$0xf]
        %v242 = vld [vmem:[%s231 + $0x10] sm:$0xf]
        %v243 = vld [vmem:[%s231 + $0x14] sm:$0xf]
        %v244 = vld [vmem:[%s231 + $0x18] sm:$0xf]
        %v245 = vld [vmem:[%s231 + $0x1c] sm:$0xf]
        %v246 = vld [vmem:[%s231 + $0x20] sm:$0xf]
        %v247 = vld [vmem:[%s231 + $0x24] sm:$0xf]
        %v248 = vld [vmem:[%s231 + $0x28] sm:$0xf]
        %v249 = vld [vmem:[%s231 + $0x2c] sm:$0xf]
        %v250 = vld [vmem:[%s231 + $0x30] sm:$0xf]
        %v251 = vld [vmem:[%s231 + $0x34] sm:$0xf]
        %v252 = vld [vmem:[%s231 + $0x38] sm:$0xf]
        %v253 = vld [vmem:[%s231 + $0x3c] sm:$0xf]
        %v254 = vld [vmem:[%s196] sm:$0xf]
        %v255 = vld [vmem:[%s196 + $0x4] sm:$0xf]
        %v256 = vld [vmem:[%s235] sm:$0x1]
        %v258 = vperm.slane %v256, 0
        %v276 = vunpack.c.l.b16 %v238
        %v277 = vunpack.c.l.b16 %v239
        %v278 = vunpack.c.l.b16 %v240
        %v279 = vunpack.c.l.b16 %v241
        %v280 = vunpack.c.l.b16 %v242
        %v281 = vunpack.c.l.b16 %v243
        %v282 = vunpack.c.l.b16 %v244
        %v283 = vunpack.c.l.b16 %v245
        %v284 = vunpack.c.l.b16 %v246
        %v285 = vunpack.c.l.b16 %v247
        %v286 = vunpack.c.l.b16 %v248
        %v287 = vunpack.c.l.b16 %v249
        %v288 = vunpack.c.l.b16 %v250
        %v289 = vunpack.c.l.b16 %v251
        %v290 = vunpack.c.l.b16 %v252
        %v291 = vunpack.c.l.b16 %v253
        %v292 = vpack.c.b16 %v277, %v276
        %v293 = vpack.c.b16 %v279, %v278
        %v294 = vpack.c.b16 %v281, %v280
        %v295 = vpack.c.b16 %v283, %v282
        %v296 = vpack.c.b16 %v285, %v284
        %v297 = vpack.c.b16 %v287, %v286
        %v298 = vpack.c.b16 %v289, %v288
        %v299 = vpack.c.b16 %v291, %v290
        %v302 = vunpack.c.l.b16 %v254
        %v303 = vunpack.c.l.b16 %v255
        %v304 = vpack.c.b16 %v303, %v302
        %vm306 = vcmask 130048
        %v308 = vsel %vm306, %v292, 0
        %v311 = vsel %vm306, %v293, 0
        %v314 = vsel %vm306, %v294, 0
        %v317 = vsel %vm306, %v295, 0
        %v320 = vsel %vm306, %v296, 0
        %v323 = vsel %vm306, %v297, 0
        %v326 = vsel %vm306, %v298, 0
        %v329 = vsel %vm306, %v299, 0
        %331 = vmatpush.bf16.msra.mxu0 0
        %332 = vmatpush.bf16.msra.mxu0 0
        %333 = vmatpush.bf16.msra.mxu0 0
        %334 = vmatpush.bf16.msra.mxu0 0
        %335 = vmatpush.bf16.msra.mxu0 0
        %336 = vmatpush.bf16.msra.mxu0 0
        %337 = vmatpush.bf16.msra.mxu0 0
        %338 = vmatpush.bf16.msra.mxu0 %v304
        %339 = vmatmul.bf16.gmra.mxu0 %v308
        %v340 = vpop.f32.mrf.mxu0
        %v341 = vadd.f32 %v258, %v340
        %v342 = vpop.f32.mrf.mxu0
        %v343 = vadd.f32 %v258, %v342
        %344 = vmatmul.bf16.gmra.mxu0 %v311
        %v345 = vpop.f32.mrf.mxu0
        %v346 = vadd.f32 %v258, %v345
        %v347 = vpop.f32.mrf.mxu0
        %v348 = vadd.f32 %v258, %v347
        %349 = vmatmul.bf16.gmra.mxu0 %v314
        %v350 = vpop.f32.mrf.mxu0
        %v351 = vadd.f32 %v258, %v350
        %v352 = vpop.f32.mrf.mxu0
        %v353 = vadd.f32 %v258, %v352
        %354 = vmatmul.bf16.gmra.mxu0 %v317
        %v355 = vpop.f32.mrf.mxu0
        %v356 = vadd.f32 %v258, %v355
        %v357 = vpop.f32.mrf.mxu0
        %v358 = vadd.f32 %v258, %v357
        %359 = vmatmul.bf16.gmra.mxu0 %v320
        %v360 = vpop.f32.mrf.mxu0
        %v361 = vadd.f32 %v258, %v360
        %v362 = vpop.f32.mrf.mxu0
        %v363 = vadd.f32 %v258, %v362
        %364 = vmatmul.bf16.gmra.mxu0 %v323
        %v365 = vpop.f32.mrf.mxu0
        %v366 = vadd.f32 %v258, %v365
        %v367 = vpop.f32.mrf.mxu0
        %v368 = vadd.f32 %v258, %v367
        %369 = vmatmul.bf16.gmra.mxu0 %v326
        %v370 = vpop.f32.mrf.mxu0
        %v371 = vadd.f32 %v258, %v370
        %v372 = vpop.f32.mrf.mxu0
        %v373 = vadd.f32 %v258, %v372
        %374 = vmatmul.bf16.gmra.mxu0 %v329
        %v375 = vpop.f32.mrf.mxu0
        %v376 = vadd.f32 %v258, %v375
        %v377 = vpop.f32.mrf.mxu0
        %v378 = vadd.f32 %v258, %v377
        %379 = vdwg.mxu0
        %380 = vst [vmem:[%s226] sm:$0xff] %v341
        %381 = vst [vmem:[%s226 + $0x8] sm:$0xff] %v343
        %382 = vst [vmem:[%s226 + $0x10] sm:$0xff] %v346
        %383 = vst [vmem:[%s226 + $0x18] sm:$0xff] %v348
        %384 = vst [vmem:[%s226 + $0x20] sm:$0xff] %v351
        %385 = vst [vmem:[%s226 + $0x28] sm:$0xff] %v353
        %386 = vst [vmem:[%s226 + $0x30] sm:$0xff] %v356
        %387 = vst [vmem:[%s226 + $0x38] sm:$0xff] %v358
        %388 = vst [vmem:[%s226 + $0x40] sm:$0xff] %v361
        %389 = vst [vmem:[%s226 + $0x48] sm:$0xff] %v363
        %390 = vst [vmem:[%s226 + $0x50] sm:$0xff] %v366
        %391 = vst [vmem:[%s226 + $0x58] sm:$0xff] %v368
        %392 = vst [vmem:[%s226 + $0x60] sm:$0xff] %v371
        %393 = vst [vmem:[%s226 + $0x68] sm:$0xff] %v373
        %394 = vst [vmem:[%s226 + $0x70] sm:$0xff] %v376
        %395 = vst [vmem:[%s226 + $0x78] sm:$0xff] %v378
        %s396 = sand.u32 %s117, 1
        %s397 = sand.u32 %s117, 1
        %s398 = smul.addr %s397, 128
        %s399 = scalar_lea.vmem [#allocation4], %s398
        // Predicated region
        $region37: #{resize_and_normalize.2} parent=31 // pred_check
          %p400 = pneg %p127
        $region38: #{resize_and_normalize.2} parent=31 // pred_check_branch
          %402 = sbr.rel (%p400) target = $region40
        $region39: #{resize_and_normalize.2} parent=31 // pred_region
          %s403 = smul.u32 16, %s21
          %s404 = smul.addr %s403, 3
          %s405 = sadd.s32 %s22, %s404
          %s406 = smul.addr %s405, 8
          %s407 = scalar_lea.vmem %s3, %s406
          // Predicated region
          $region41: #{resize_and_normalize.2} parent=39 // pred_check
            _
          $region42: #{resize_and_normalize.2} parent=39 // pred_check_branch
            %409 = sbr.rel (0) target = $region44
          $region43: #{resize_and_normalize.2} parent=39 // pred_region
            // Predicated region
            $region45: #{resize_and_normalize.2} parent=43 // pred_check
              _
            $region46: #{resize_and_normalize.2} parent=43 // pred_check_branch
              %411 = sbr.rel (0) target = $region48
            $region47: #{resize_and_normalize.2} parent=43 // pred_region
              // Predicated region
              $region60: #{resize_and_normalize.2} parent=47 // pred_check
                _
              $region61: #{resize_and_normalize.2} parent=47 // pred_check_branch
                %457 = sbr.rel (0) target = $region63
              $region62: #{resize_and_normalize.2} parent=47 // pred_region
                loop: start=0, step=1, limit=1
                $region64: #{resize_and_normalize.2} parent=62 // loop_pre_header
                  _
                $region65: #{resize_and_normalize.2} parent=62 // loop_header
                  %s459 = sphi 0, %s463
                  %p460 = scmp.ge.s32.totalorder %s459, 1
                  %s464 = sphi %s399, %s399
                  %s465 = sphi %s407, %s407
                $region66: #{resize_and_normalize.2} parent=62 // loop_header_branch
                  %462 = sbr.rel (%p460) target = $region70
                $region67: #{resize_and_normalize.2} parent=62 // loop_body
                  %v466 = vld [vmem:[%s464] sm:$0xff]
                  %467 = vst [vmem:[%s465] sm:$0xff] %v466
                  %v468 = vld [vmem:[%s464 + $0x8] sm:$0xff]
                  %469 = vst [vmem:[%s465 + $0x18] sm:$0xff] %v468
                  %v470 = vld [vmem:[%s464 + $0x10] sm:$0xff]
                  %471 = vst [vmem:[%s465 + $0x30] sm:$0xff] %v470
                  %v472 = vld [vmem:[%s464 + $0x18] sm:$0xff]
                  %473 = vst [vmem:[%s465 + $0x48] sm:$0xff] %v472
                  %v474 = vld [vmem:[%s464 + $0x20] sm:$0xff]
                  %475 = vst [vmem:[%s465 + $0x60] sm:$0xff] %v474
                  %v476 = vld [vmem:[%s464 + $0x28] sm:$0xff]
                  %477 = vst [vmem:[%s465 + $0x78] sm:$0xff] %v476
                  %v478 = vld [vmem:[%s464 + $0x30] sm:$0xff]
                  %479 = vst [vmem:[%s465 + $0x90] sm:$0xff] %v478
                  %v480 = vld [vmem:[%s464 + $0x38] sm:$0xff]
                  %481 = vst [vmem:[%s465 + $0xa8] sm:$0xff] %v480
                  %v482 = vld [vmem:[%s464 + $0x40] sm:$0xff]
                  %483 = vst [vmem:[%s465 + $0xc0] sm:$0xff] %v482
                  %v484 = vld [vmem:[%s464 + $0x48] sm:$0xff]
                  %485 = vst [vmem:[%s465 + $0xd8] sm:$0xff] %v484
                  %v486 = vld [vmem:[%s464 + $0x50] sm:$0xff]
                  %487 = vst [vmem:[%s465 + $0xf0] sm:$0xff] %v486
                  %v488 = vld [vmem:[%s464 + $0x58] sm:$0xff]
                  %489 = vst [vmem:[%s465 + $0x108] sm:$0xff] %v488
                  %v490 = vld [vmem:[%s464 + $0x60] sm:$0xff]
                  %491 = vst [vmem:[%s465 + $0x120] sm:$0xff] %v490
                  %v492 = vld [vmem:[%s464 + $0x68] sm:$0xff]
                  %493 = vst [vmem:[%s465 + $0x138] sm:$0xff] %v492
                  %v494 = vld [vmem:[%s464 + $0x70] sm:$0xff]
                  %495 = vst [vmem:[%s465 + $0x150] sm:$0xff] %v494
                  %v496 = vld [vmem:[%s464 + $0x78] sm:$0xff]
                  %497 = vst [vmem:[%s465 + $0x168] sm:$0xff] %v496
                $region68: #{resize_and_normalize.2} parent=62 // loop_footer
                  %s463 = sadd.s32 1, %s459
                $region69: #{resize_and_normalize.2} parent=62 // loop_footer_branch
                  %458 = sbr.rel target = $region65
                $region70: #{resize_and_normalize.2} parent=62 // loop_exit
                  _
              $region63: #{resize_and_normalize.2} parent=47 // pred_fallthru
                _
              // Predicated region
              $region71: #{resize_and_normalize.2} parent=47 // pred_check
                _
              $region72: #{resize_and_normalize.2} parent=47 // pred_check_branch
                %499 = sbr.rel target = $region74
              $region73: #{resize_and_normalize.2} parent=47 // pred_region
                _
              $region74: #{resize_and_normalize.2} parent=47 // pred_fallthru
                _
            $region48: #{resize_and_normalize.2} parent=43 // pred_fallthru
              _
            // Predicated region
            $region49: #{resize_and_normalize.2} parent=43 // pred_check
              _
            $region50: #{resize_and_normalize.2} parent=43 // pred_check_branch
              %413 = sbr.rel target = $region52
            $region51: #{resize_and_normalize.2} parent=43 // pred_region
              %s415 = ssub.s32 256, 1
              loop: start=0, step=1, limit=1
              $region53: #{resize_and_normalize.2} parent=51 // loop_pre_header
                _
              $region54: #{resize_and_normalize.2} parent=51 // loop_header
                %s417 = sphi 0, %s421
                %p418 = scmp.ge.s32.totalorder %s417, 1
                %s422 = sphi %s399, %s399
                %s423 = sphi %s407, %s407
              $region55: #{resize_and_normalize.2} parent=51 // loop_header_branch
                %420 = sbr.rel (%p418) target = $region59
              $region56: #{resize_and_normalize.2} parent=51 // loop_body
                %v424 = vld [vmem:[%s422] sm:%s415]
                %425 = vst [vmem:[%s423] sm:%s415] %v424
                %v426 = vld [vmem:[%s422 + $0x8] sm:%s415]
                %427 = vst [vmem:[%s423 + $0x18] sm:%s415] %v426
                %v428 = vld [vmem:[%s422 + $0x10] sm:%s415]
                %429 = vst [vmem:[%s423 + $0x30] sm:%s415] %v428
                %v430 = vld [vmem:[%s422 + $0x18] sm:%s415]
                %431 = vst [vmem:[%s423 + $0x48] sm:%s415] %v430
                %v432 = vld [vmem:[%s422 + $0x20] sm:%s415]
                %433 = vst [vmem:[%s423 + $0x60] sm:%s415] %v432
                %v434 = vld [vmem:[%s422 + $0x28] sm:%s415]
                %435 = vst [vmem:[%s423 + $0x78] sm:%s415] %v434
                %v436 = vld [vmem:[%s422 + $0x30] sm:%s415]
                %437 = vst [vmem:[%s423 + $0x90] sm:%s415] %v436
                %v438 = vld [vmem:[%s422 + $0x38] sm:%s415]
                %439 = vst [vmem:[%s423 + $0xa8] sm:%s415] %v438
                %v440 = vld [vmem:[%s422 + $0x40] sm:%s415]
                %441 = vst [vmem:[%s423 + $0xc0] sm:%s415] %v440
                %v442 = vld [vmem:[%s422 + $0x48] sm:%s415]
                %443 = vst [vmem:[%s423 + $0xd8] sm:%s415] %v442
                %v444 = vld [vmem:[%s422 + $0x50] sm:%s415]
                %445 = vst [vmem:[%s423 + $0xf0] sm:%s415] %v444
                %v446 = vld [vmem:[%s422 + $0x58] sm:%s415]
                %447 = vst [vmem:[%s423 + $0x108] sm:%s415] %v446
                %v448 = vld [vmem:[%s422 + $0x60] sm:%s415]
                %449 = vst [vmem:[%s423 + $0x120] sm:%s415] %v448
                %v450 = vld [vmem:[%s422 + $0x68] sm:%s415]
                %451 = vst [vmem:[%s423 + $0x138] sm:%s415] %v450
                %v452 = vld [vmem:[%s422 + $0x70] sm:%s415]
                %453 = vst [vmem:[%s423 + $0x150] sm:%s415] %v452
                %v454 = vld [vmem:[%s422 + $0x78] sm:%s415]
                %455 = vst [vmem:[%s423 + $0x168] sm:%s415] %v454
              $region57: #{resize_and_normalize.2} parent=51 // loop_footer
                %s421 = sadd.s32 1, %s417
              $region58: #{resize_and_normalize.2} parent=51 // loop_footer_branch
                %416 = sbr.rel target = $region54
              $region59: #{resize_and_normalize.2} parent=51 // loop_exit
                _
            $region52: #{resize_and_normalize.2} parent=43 // pred_fallthru
              _
          $region44: #{resize_and_normalize.2} parent=39 // pred_fallthru
            _
          %500 = vnop
        $region40: #{resize_and_normalize.2} parent=31 // pred_fallthru
          _
      $region32: #{resize_and_normalize.2} parent=5 // pred_fallthru
        _
      %p501 = scmp.le.s32.totalorder 2, %s12
      // Predicated region
      $region75: #{resize_and_normalize.2} parent=5 // pred_check
        %p502 = pneg %p501
      $region76: #{resize_and_normalize.2} parent=5 // pred_check_branch
        %504 = sbr.rel (%p502) target = $region78
      $region77: #{resize_and_normalize.2} parent=5 // pred_region
        %s505 = ssub.s32 %s12, 2
        // Predicated region
        $region79: #{resize_and_normalize.2} parent=77 // pred_check
          %p506 = pneg %p133
        $region80: #{resize_and_normalize.2} parent=77 // pred_check_branch
          %508 = sbr.rel (%p506) target = $region82
        $region81: #{resize_and_normalize.2} parent=77 // pred_region
          %s509 = sand.u32 %s118, 1
          %s510 = sand.u32 %s118, 1
          %s511 = smul.addr %s510, 128
          %s512 = scalar_lea.vmem [#allocation4], %s511
        $region82: #{resize_and_normalize.2} parent=77 // pred_fallthru
          _
      $region78: #{resize_and_normalize.2} parent=5 // pred_fallthru
        _
    $region6: #{resize_and_normalize.2} parent=1 // loop_footer
      %s16 = sadd.s32 1, %s12
    $region7: #{resize_and_normalize.2} parent=1 // loop_footer_branch
      %11 = sbr.rel target = $region3
    $region8: #{resize_and_normalize.2} parent=1 // loop_exit
      _
    %513 = vsyncpa [#allocation3], 1
    %s514 = scalar_lea.sflag [#allocation3], 1
    %515 = vsyncpa %s514, 1

// kernel: resize_and_normalize.3
$region0: #{resize_and_normalize.3}
  #allocation0 [shape = 'u32[]', space=smem, size = 0x4, offset = 0x4, fixed_abs, tag = 'smem constant byte address 0x4 - core index']
  #allocation1 [shape = 'u32[72,128]{1,0:T(1,128)}', space=vmem, size = 0x9000, scoped, tag = 'internal scratch']
  %s0 = inlined_call_operand.vmem [shape: bf16[2048,16], index: 0, kind: input, shape index: {}]
  %s1 = inlined_call_operand.hbm [shape: bf16[16,384], index: 1, kind: input, shape index: {}]
  %s2 = inlined_call_operand.vmem [shape: f32[1,384], index: 2, kind: input, shape index: {}]
  %s3 = inlined_call_operand.vmem [shape: f32[2048,384], index: 3, kind: output, shape index: {}]
  %s4 = sld [smem:[#allocation0]]
  $region49: #{resize_and_normalize.3} parent=0
    _
  %s6 = ssub.s32 1, %s4
  %s7 = scalar_select 0, %s6, %s4
  $region1: #{resize_and_normalize.3} parent=0
    #allocation2 [shape = 'u8[12288]{0}', space=vmem, size = 0x3000, scoped, tag = 'input window, operand 1, single buffered']
    #allocation3 [shape = 's32[2]{0}', space=sflag, size = 0x8, scoped, tag = 'scoped memory for resize_and_normalize.3']
    %8 = vsyncpa [#allocation3], 0
    loop: start=0, step=1, limit=10
    $region2: #{resize_and_normalize.3} parent=1 // loop_pre_header
      _
    $region3: #{resize_and_normalize.3} parent=1 // loop_header
      %s10 = sphi 0, %s14
      %p11 = scmp.ge.s32.totalorder %s10, 10
      %s17 = sphi 0, %s29
      %s18 = sphi 0, %s25
      %s19 = sphi 0, %s17
      %s20 = sphi 0, %s18
      %s21 = sphi 0, %s19
      %s22 = sphi 0, %s20
      %s32 = sphi 0, %s34
      %s35 = sphi 0, %s32
      %s36 = sphi 0, %s35
      %s52 = sphi 0, %s36
      %s58 = sphi 0, %s60
      %s61 = sphi 0, %s58
      %s62 = sphi 0, %s61
      %s78 = sphi 0, %s62
      %s84 = sphi 0, %s86
      %s87 = sphi 0, %s84
      %s88 = sphi 0, %s87
      %s104 = sphi 0, %s88
      %s112 = sphi 0, %s114
      %s115 = sphi 0, %s112
      %s116 = sphi 0, %s115
      %s132 = sphi 0, %s116
    $region4: #{resize_and_normalize.3} parent=1 // loop_header_branch
      %13 = sbr.rel (%p11) target = $region8
    $region5: #{resize_and_normalize.3} parent=1 // loop_body
      %s15 = ssub.s32 %s10, 1
      %s16 = ssub.s32 %s10, 2
      %s23 = sadd.s32 1, %s18
      %p24 = scmp.ge.s32.totalorder %s23, 1
      %s25 = scalar_select %p24, 0, %s23
      %s26 = sadd.s32 1, %s17
      %s27 = scalar_select %p24, %s26, %s17
      %p28 = scmp.ge.s32.totalorder %s27, 8
      %s29 = scalar_select %p28, 0, %s27
      %s30 = ssub.s32 %s17, %s29
      %p31 = scmp.eq.s32.totalorder %s30, 0
      %s33 = sadd.s32 %s32, 1
      %s34 = scalar_select %p31, %s32, %s33
      %p37 = pneg %p31
      %p38 = scmp.eq.s32.totalorder %s10, 7
      %p39 = por %p37, %p38
      %p40 = scmp.ne.s32.totalorder %s32, %s35
      %p41 = scmp.eq.s32.totalorder %s10, 0
      %p42 = por %p40, %p41
      %p43 = scmp.ne.s32.totalorder %s32, %s35
      %p44 = scmp.eq.s32.totalorder %s15, 7
      %p45 = por %p43, %p44
      %p46 = scmp.ne.s32.totalorder %s35, %s36
      %p47 = scmp.eq.s32.totalorder %s15, 0
      %p48 = por %p46, %p47
      %p49 = scmp.ne.s32.totalorder %s35, %s36
      %p50 = scmp.eq.s32.totalorder %s16, 7
      %p51 = por %p49, %p50
      %p53 = scmp.ne.s32.totalorder %s36, %s52
      %p54 = scmp.eq.s32.totalorder %s16, 0
      %p55 = por %p53, %p54
      %s56 = ssub.s32 %s18, %s25
      %p57 = scmp.eq.s32.totalorder %s56, 0
      %s59 = sadd.s32 %s58, 1
      %s60 = scalar_select %p57, %s58, %s59
      %p63 = pneg %p57
      %p64 = scmp.eq.s32.totalorder %s10, 7
      %p65 = por %p63, %p64
      %p66 = scmp.ne.s32.totalorder %s58, %s61
      %p67 = scmp.eq.s32.totalorder %s10, 0
      %p68 = por %p66, %p67
      %p69 = scmp.ne.s32.totalorder %s58, %s61
      %p70 = scmp.eq.s32.totalorder %s15, 7
      %p71 = por %p69, %p70
      %p72 = scmp.ne.s32.totalorder %s61, %s62
      %p73 = scmp.eq.s32.totalorder %s15, 0
      %p74 = por %p72, %p73
      %p75 = scmp.ne.s32.totalorder %s61, %s62
      %p76 = scmp.eq.s32.totalorder %s16, 7
      %p77 = por %p75, %p76
      %p79 = scmp.ne.s32.totalorder %s62, %s78
      %p80 = scmp.eq.s32.totalorder %s16, 0
      %p81 = por %p79, %p80
      %s82 = ssub.s32 %s18, %s25
      %p83 = scmp.eq.s32.totalorder %s82, 0
      %s85 = sadd.s32 %s84, 1
      %s86 = scalar_select %p83, %s84, %s85
      %p89 = pneg %p83
      %p90 = scmp.eq.s32.totalorder %s10, 7
      %p91 = por %p89, %p90
      %p92 = scmp.ne.s32.totalorder %s84, %s87
      %p93 = scmp.eq.s32.totalorder %s10, 0
      %p94 = por %p92, %p93
      %p95 = scmp.ne.s32.totalorder %s84, %s87
      %p96 = scmp.eq.s32.totalorder %s15, 7
      %p97 = por %p95, %p96
      %p98 = scmp.ne.s32.totalorder %s87, %s88
      %p99 = scmp.eq.s32.totalorder %s15, 0
      %p100 = por %p98, %p99
      %p101 = scmp.ne.s32.totalorder %s87, %s88
      %p102 = scmp.eq.s32.totalorder %s16, 7
      %p103 = por %p101, %p102
      %p105 = scmp.ne.s32.totalorder %s88, %s104
      %p106 = scmp.eq.s32.totalorder %s16, 0
      %p107 = por %p105, %p106
      %s108 = ssub.s32 %s17, %s29
      %s109 = ssub.s32 %s18, %s25
      %s110 = sor.u32 %s108, %s109
      %p111 = scmp.eq.s32.totalorder %s110, 0
      %s113 = sadd.s32 %s112, 1
      %s114 = scalar_select %p111, %s112, %s113
      %p117 = pneg %p111
      %p118 = scmp.eq.s32.totalorder %s10, 7
      %p119 = por %p117, %p118
      %p120 = scmp.ne.s32.totalorder %s112, %s115
      %p121 = scmp.eq.s32.totalorder %s10, 0
      %p122 = por %p120, %p121
      %p123 = scmp.ne.s32.totalorder %s112, %s115
      %p124 = scmp.eq.s32.totalorder %s15, 7
      %p125 = por %p123, %p124
      %p126 = scmp.ne.s32.totalorder %s115, %s116
      %p127 = scmp.eq.s32.totalorder %s15, 0
      %p128 = por %p126, %p127
      %p129 = scmp.ne.s32.totalorder %s115, %s116
      %p130 = scmp.eq.s32.totalorder %s16, 7
      %p131 = por %p129, %p130
      %p133 = scmp.ne.s32.totalorder %s116, %s132
      %p134 = scmp.eq.s32.totalorder %s16, 0
      %p135 = por %p133, %p134
      %p136 = scmp.le.s32.totalorder 1, %s10
      %p137 = scmp.lt.s32.totalorder %s10, 9
      %p138 = pnand %p136, %p137
      %p139 = pneg %p138
      // Predicated region
      $region9: #{resize_and_normalize.3} parent=5 // pred_check
        _
      $region10: #{resize_and_normalize.3} parent=5 // pred_check_branch
        %141 = sbr.rel (%p138) target = $region12
      $region11: #{resize_and_normalize.3} parent=5 // pred_region
        %s142 = ssub.s32 %s10, 1
        // Predicated region
        $region13: #{resize_and_normalize.3} parent=11 // pred_check
          %p143 = pneg %p74
        $region14: #{resize_and_normalize.3} parent=11 // pred_check_branch
          %145 = sbr.rel (%p143) target = $region16
        $region15: #{resize_and_normalize.3} parent=11 // pred_region
          %s146 = smul.u32 3, %s20
          %148 = vsyncadd [#allocation3], 0
          %s149 = smul.addr %s146, 4
          %s150 = scalar_lea.hbm %s1, %s149
          %s151 = sshll.u32 %s150, 4
          %s152 = int_to_ptr.hbm [resolvable:$true] %s151
          %s153 = sshll.u32 [#allocation2], 4
          %s154 = int_to_ptr.vmem [resolvable:$true] %s153
          %159 = dma.hbm_to_vmem [thread:$0]  %s152, 384, %s154, [#allocation3], 192, 192, 12
        $region16: #{resize_and_normalize.3} parent=11 // pred_fallthru
          _
        // Predicated region
        $region17: #{resize_and_normalize.3} parent=11 // pred_check
          %p160 = pneg %p100
        $region18: #{resize_and_normalize.3} parent=11 // pred_check_branch
          %162 = sbr.rel (%p160) target = $region20
        $region19: #{resize_and_normalize.3} parent=11 // pred_region
          %s163 = smul.u32 3, %s20
          %p164 = scmp.lt.s32.totalorder %s163, 2
          %s165 = scalar_select %p164, %s163, 2
          %s166 = scalar_lea.vmem %s2, %s165
          %s167 = smul.u32 3, %s20
        $region20: #{resize_and_normalize.3} parent=11 // pred_fallthru
          _
      $region12: #{resize_and_normalize.3} parent=5 // pred_fallthru
        _
      %p168 = scmp.lt.s32.totalorder %s10, 8
      // Predicated region
      $region21: #{resize_and_normalize.3} parent=5 // pred_check
        %p169 = pneg %p168
      $region22: #{resize_and_normalize.3} parent=5 // pred_check_branch
        %171 = sbr.rel (%p169) target = $region24
      $region23: #{resize_and_normalize.3} parent=5 // pred_region
        // Predicated region
        $region25: #{resize_and_normalize.3} parent=23 // pred_check
          %p172 = pneg %p42
        $region26: #{resize_and_normalize.3} parent=23 // pred_check_branch
          %174 = sbr.rel (%p172) target = $region28
        $region27: #{resize_and_normalize.3} parent=23 // pred_region
          %s175 = smul.u32 32, %s17
          %p176 = scmp.lt.s32.totalorder %s175, 255
          %s177 = scalar_select %p176, %s175, 255
          %s178 = smul.addr %s177, 4
          %s179 = scalar_lea.vmem %s0, %s178
          %s180 = smul.u32 32, %s17
        $region28: #{resize_and_normalize.3} parent=23 // pred_fallthru
          _
      $region24: #{resize_and_normalize.3} parent=5 // pred_fallthru
        _
      %p181 = scmp.le.s32.totalorder 1, %s10
      %p182 = scmp.lt.s32.totalorder %s10, 9
      %p183 = pnand %p181, %p182
      %p184 = pneg %p183
      // Predicated region
      $region29: #{resize_and_normalize.3} parent=5 // pred_check
        _
      $region30: #{resize_and_normalize.3} parent=5 // pred_check_branch
        %186 = sbr.rel (%p183) target = $region32
      $region31: #{resize_and_normalize.3} parent=5 // pred_region
        %s187 = ssub.s32 %s10, 1
        // Predicated region
        $region33: #{resize_and_normalize.3} parent=31 // pred_check
          %p188 = pneg %p74
        $region34: #{resize_and_normalize.3} parent=31 // pred_check_branch
          %190 = sbr.rel (%p188) target = $region36
        $region35: #{resize_and_normalize.3} parent=31 // pred_region
          %192 = dma.done [#allocation3], 384
        $region36: #{resize_and_normalize.3} parent=31 // pred_fallthru
          _
        %s193 = smul.u32 32, %s19
        %p194 = scmp.lt.s32.totalorder %s193, 255
        %s195 = scalar_select %p194, %s193, 255
        %s196 = smul.addr %s195, 4
        %s197 = scalar_lea.vmem %s0, %s196
        %p198 = pneg %p48
        %p199 = pneg %p45
        %p200 = pneg %p74
        %p201 = pneg %p71
        %s202 = smul.u32 3, %s20
        %p203 = scmp.lt.s32.totalorder %s202, 2
        %s204 = scalar_select %p203, %s202, 2
        %s205 = scalar_lea.vmem %s2, %s204
        %p206 = pneg %p100
        %p207 = pneg %p97
        %p208 = pneg %p128
        %p209 = pneg %p125
        %s210 = smul.u32 32, %s19
        %s211 = smul.u32 3, %s20
        %p212 = scmp.lt.s32.totalorder %s210, 255
        %s213 = scalar_select %p212, %s210, 255
        %p214 = scmp.lt.s32.totalorder %s211, 2
        %s215 = scalar_select %p214, %s211, 2
        %s216 = smul.addr %s213, 3
        %s217 = sadd.s32 %s215, %s216
        %s218 = smul.addr %s217, 8
        %s219 = scalar_lea.vmem %s3, %s218
        %s220 = smul.u32 32, %s19
        %p221 = scmp.lt.s32.totalorder %s220, 255
        %s222 = scalar_select %p221, %s220, 255
        %s223 = smul.addr %s222, 4
        %s224 = scalar_lea.vmem %s0, %s223
        %s225 = smul.u32 32, %s19
        %s226 = smul.u32 3, %s20
        %s227 = smul.u32 3, %s20
        %p228 = scmp.lt.s32.totalorder %s227, 2
        %s229 = scalar_select %p228, %s227, 2
        %s230 = scalar_lea.vmem %s2, %s229
        %s231 = smul.u32 3, %s20
        %s232 = smul.u32 32, %s19
        %s233 = smul.u32 3, %s20
        %p234 = scmp.lt.s32.totalorder %s232, 255
        %s235 = scalar_select %p234, %s232, 255
        %p236 = scmp.lt.s32.totalorder %s233, 2
        %s237 = scalar_select %p236, %s233, 2
        %s238 = smul.addr %s235, 3
        %s239 = sadd.s32 %s237, %s238
        %s240 = smul.addr %s239, 8
        %s241 = scalar_lea.vmem %s3, %s240
        %s242 = smul.u32 32, %s19
        %s243 = smul.u32 3, %s20
        %v245 = vld [vmem:[%s224] sm:$0xf]
        %v246 = vld [vmem:[%s224 + $0x4] sm:$0xf]
        %v247 = vld [vmem:[%s224 + $0x8] sm:$0xf]
        %v248 = vld [vmem:[%s224 + $0xc] sm:$0xf]
        %v249 = vld [vmem:[%s224 + $0x10] sm:$0xf]
        %v250 = vld [vmem:[%s224 + $0x14] sm:$0xf]
        %v251 = vld [vmem:[%s224 + $0x18] sm:$0xf]
        %v252 = vld [vmem:[%s224 + $0x1c] sm:$0xf]
        %v253 = vld [vmem:[%s224 + $0x20] sm:$0xf]
        %v254 = vld [vmem:[%s224 + $0x24] sm:$0xf]
        %v255 = vld [vmem:[%s224 + $0x28] sm:$0xf]
        %v256 = vld [vmem:[%s224 + $0x2c] sm:$0xf]
        %v257 = vld [vmem:[%s224 + $0x30] sm:$0xf]
        %v258 = vld [vmem:[%s224 + $0x34] sm:$0xf]
        %v259 = vld [vmem:[%s224 + $0x38] sm:$0xf]
        %v260 = vld [vmem:[%s224 + $0x3c] sm:$0xf]
        %v261 = vld [vmem:[%s224 + $0x40] sm:$0xf]
        %v262 = vld [vmem:[%s224 + $0x44] sm:$0xf]
        %v263 = vld [vmem:[%s224 + $0x48] sm:$0xf]
        %v264 = vld [vmem:[%s224 + $0x4c] sm:$0xf]
        %v265 = vld [vmem:[%s224 + $0x50] sm:$0xf]
        %v266 = vld [vmem:[%s224 + $0x54] sm:$0xf]
        %v267 = vld [vmem:[%s224 + $0x58] sm:$0xf]
        %v268 = vld [vmem:[%s224 + $0x5c] sm:$0xf]
        %v269 = vld [vmem:[%s224 + $0x60] sm:$0xf]
        %v270 = vld [vmem:[%s224 + $0x64] sm:$0xf]
        %v271 = vld [vmem:[%s224 + $0x68] sm:$0xf]
        %v272 = vld [vmem:[%s224 + $0x6c] sm:$0xf]
        %v273 = vld [vmem:[%s224 + $0x70] sm:$0xf]
        %v274 = vld [vmem:[%s224 + $0x74] sm:$0xf]
        %v275 = vld [vmem:[%s224 + $0x78] sm:$0xf]
        %v276 = vld [vmem:[%s224 + $0x7c] sm:$0xf]
        %v277 = vld [vmem:[#allocation2] sm:$0xff]
        %v278 = vld [vmem:[#allocation2 + $0x8] sm:$0xf]
        %v279 = vld [vmem:[#allocation2 + $0xc] sm:$0xff]
        %v280 = vld [vmem:[#allocation2 + $0x14] sm:$0xf]
        %v281 = vld [vmem:[%s230] sm:$0x7]
        %v283 = vperm.slane %v281, 0
        %v284 = vperm.slane %v281, 1
        %v285 = vperm.slane %v281, 2
        %v321 = vunpack.c.l.b16 %v245
        %v322 = vunpack.c.l.b16 %v246
        %v323 = vunpack.c.l.b16 %v247
        %v324 = vunpack.c.l.b16 %v248
        %v325 = vunpack.c.l.b16 %v249
        %v326 = vunpack.c.l.b16 %v250
        %v327 = vunpack.c.l.b16 %v251
        %v328 = vunpack.c.l.b16 %v252
        %v329 = vunpack.c.l.b16 %v253
        %v330 = vunpack.c.l.b16 %v254
        %v331 = vunpack.c.l.b16 %v255
        %v332 = vunpack.c.l.b16 %v256
        %v333 = vunpack.c.l.b16 %v257
        %v334 = vunpack.c.l.b16 %v258
        %v335 = vunpack.c.l.b16 %v259
        %v336 = vunpack.c.l.b16 %v260
        %v337 = vunpack.c.l.b16 %v261
        %v338 = vunpack.c.l.b16 %v262
        %v339 = vunpack.c.l.b16 %v263
        %v340 = vunpack.c.l.b16 %v264
        %v341 = vunpack.c.l.b16 %v265
        %v342 = vunpack.c.l.b16 %v266
        %v343 = vunpack.c.l.b16 %v267
        %v344 = vunpack.c.l.b16 %v268
        %v345 = vunpack.c.l.b16 %v269
        %v346 = vunpack.c.l.b16 %v270
        %v347 = vunpack.c.l.b16 %v271
        %v348 = vunpack.c.l.b16 %v272
        %v349 = vunpack.c.l.b16 %v273
        %v350 = vunpack.c.l.b16 %v274
        %v351 = vunpack.c.l.b16 %v275
        %v352 = vunpack.c.l.b16 %v276
        %v353 = vpack.c.b16 %v322, %v321
        %v354 = vpack.c.b16 %v324, %v323
        %v355 = vpack.c.b16 %v326, %v325
        %v356 = vpack.c.b16 %v328, %v327
        %v357 = vpack.c.b16 %v330, %v329
        %v358 = vpack.c.b16 %v332, %v331
        %v359 = vpack.c.b16 %v334, %v333
        %v360 = vpack.c.b16 %v336, %v335
        %v361 = vpack.c.b16 %v338, %v337
        %v362 = vpack.c.b16 %v340, %v339
        %v363 = vpack.c.b16 %v342, %v341
        %v364 = vpack.c.b16 %v344, %v343
        %v365 = vpack.c.b16 %v346, %v345
        %v366 = vpack.c.b16 %v348, %v347
        %v367 = vpack.c.b16 %v350, %v349
        %v368 = vpack.c.b16 %v352, %v351
        %v373 = vunpack.c.l.b16 %v277
        %v374 = vunpack.c.h.b16 %v277
        %v375 = vunpack.c.l.b16 %v278
        %v376 = vunpack.c.l.b16 %v279
        %v377 = vunpack.c.h.b16 %v279
        %v378 = vunpack.c.l.b16 %v280
        %v379 = vpack.c.b16 %v376, %v373
        %v380 = vpack.c.b16 %v377, %v374
        %v381 = vpack.c.b16 %v378, %v375
        %vm385 = vcmask 130048
        %v387 = vsel %vm385, %v353, 0
        %v390 = vsel %vm385, %v354, 0
        %v393 = vsel %vm385, %v355, 0
        %v396 = vsel %vm385, %v356, 0
        %v399 = vsel %vm385, %v357, 0
        %v402 = vsel %vm385, %v358, 0
        %v405 = vsel %vm385, %v359, 0
        %v408 = vsel %vm385, %v360, 0
        %v411 = vsel %vm385, %v361, 0
        %v414 = vsel %vm385, %v362, 0
        %v417 = vsel %vm385, %v363, 0
        %v420 = vsel %vm385, %v364, 0
        %v423 = vsel %vm385, %v365, 0
        %v426 = vsel %vm385, %v366, 0
        %v429 = vsel %vm385, %v367, 0
        %v432 = vsel %vm385, %v368, 0
        %434 = vmatpush.bf16.msra.mxu0 0
        %435 = vmatpush.bf16.msra.mxu0 0
        %436 = vmatpush.bf16.msra.mxu0 0
        %437 = vmatpush.bf16.msra.mxu0 0
        %438 = vmatpush.bf16.msra.mxu0 0
        %439 = vmatpush.bf16.msra.mxu0 0
        %440 = vmatpush.bf16.msra.mxu0 0
        %441 = vmatpush.bf16.msra.mxu0 %v379
        %442 = vmatmul.bf16.gmra.mxu0 %v387
        %v443 = vpop.f32.mrf.mxu0
        %v444 = vadd.f32 %v283, %v443
        %v445 = vpop.f32.mrf.mxu0
        %v446 = vadd.f32 %v283, %v445
        %447 = vmatmul.bf16.gmra.mxu0 %v390
        %v448 = vpop.f32.mrf.mxu0
        %v449 = vadd.f32 %v283, %v448
        %v450 = vpop.f32.mrf.mxu0
        %v451 = vadd.f32 %v283, %v450
        %452 = vmatmul.bf16.gmra.mxu0 %v393
        %v453 = vpop.f32.mrf.mxu0
        %v454 = vadd.f32 %v283, %v453
        %v455 = vpop.f32.mrf.mxu0
        %v456 = vadd.f32 %v283, %v455
        %457 = vmatmul.bf16.gmra.mxu0 %v396
        %v458 = vpop.f32.mrf.mxu0
        %v459 = vadd.f32 %v283, %v458
        %v460 = vpop.f32.mrf.mxu0
        %v461 = vadd.f32 %v283, %v460
        %462 = vmatmul.bf16.gmra.mxu0 %v399
        %v463 = vpop.f32.mrf.mxu0
        %v464 = vadd.f32 %v283, %v463
        %v465 = vpop.f32.mrf.mxu0
        %v466 = vadd.f32 %v283, %v465
        %467 = vmatmul.bf16.gmra.mxu0 %v402
        %v468 = vpop.f32.mrf.mxu0
        %v469 = vadd.f32 %v283, %v468
        %v470 = vpop.f32.mrf.mxu0
        %v471 = vadd.f32 %v283, %v470
        %472 = vmatmul.bf16.gmra.mxu0 %v405
        %v473 = vpop.f32.mrf.mxu0
        %v474 = vadd.f32 %v283, %v473
        %v475 = vpop.f32.mrf.mxu0
        %v476 = vadd.f32 %v283, %v475
        %477 = vmatmul.bf16.gmra.mxu0 %v408
        %v478 = vpop.f32.mrf.mxu0
        %v479 = vadd.f32 %v283, %v478
        %v480 = vpop.f32.mrf.mxu0
        %v481 = vadd.f32 %v283, %v480
        %482 = vmatmul.bf16.gmra.mxu0 %v411
        %v483 = vpop.f32.mrf.mxu0
        %v484 = vadd.f32 %v283, %v483
        %v485 = vpop.f32.mrf.mxu0
        %v486 = vadd.f32 %v283, %v485
        %487 = vmatmul.bf16.gmra.mxu0 %v414
        %v488 = vpop.f32.mrf.mxu0
        %v489 = vadd.f32 %v283, %v488
        %v490 = vpop.f32.mrf.mxu0
        %v491 = vadd.f32 %v283, %v490
        %492 = vmatmul.bf16.gmra.mxu0 %v417
        %v493 = vpop.f32.mrf.mxu0
        %v494 = vadd.f32 %v283, %v493
        %v495 = vpop.f32.mrf.mxu0
        %v496 = vadd.f32 %v283, %v495
        %497 = vmatmul.bf16.gmra.mxu0 %v420
        %v498 = vpop.f32.mrf.mxu0
        %v499 = vadd.f32 %v283, %v498
        %v500 = vpop.f32.mrf.mxu0
        %v501 = vadd.f32 %v283, %v500
        %502 = vmatmul.bf16.gmra.mxu0 %v423
        %v503 = vpop.f32.mrf.mxu0
        %v504 = vadd.f32 %v283, %v503
        %v505 = vpop.f32.mrf.mxu0
        %v506 = vadd.f32 %v283, %v505
        %507 = vmatmul.bf16.gmra.mxu0 %v426
        %v508 = vpop.f32.mrf.mxu0
        %v509 = vadd.f32 %v283, %v508
        %v510 = vpop.f32.mrf.mxu0
        %v511 = vadd.f32 %v283, %v510
        %512 = vmatmul.bf16.gmra.mxu0 %v429
        %v513 = vpop.f32.mrf.mxu0
        %v514 = vadd.f32 %v283, %v513
        %v515 = vpop.f32.mrf.mxu0
        %v516 = vadd.f32 %v283, %v515
        %517 = vmatmul.bf16.gmra.mxu0 %v432
        %v518 = vpop.f32.mrf.mxu0
        %v519 = vadd.f32 %v283, %v518
        %v520 = vpop.f32.mrf.mxu0
        %v521 = vadd.f32 %v283, %v520
        %522 = vdwg.mxu0
        %523 = vmatpush.bf16.msra.mxu0 0
        %524 = vmatpush.bf16.msra.mxu0 0
        %525 = vmatpush.bf16.msra.mxu0 0
        %526 = vmatpush.bf16.msra.mxu0 0
        %527 = vmatpush.bf16.msra.mxu0 0
        %528 = vmatpush.bf16.msra.mxu0 0
        %529 = vmatpush.bf16.msra.mxu0 0
        %530 = vmatpush.bf16.msra.mxu0 %v380
        %531 = vmatmul.bf16.gmra.mxu0 %v387
        %v532 = vpop.f32.mrf.mxu0
        %v533 = vadd.f32 %v284, %v532
        %v534 = vpop.f32.mrf.mxu0
        %v535 = vadd.f32 %v284, %v534
        %536 = vmatmul.bf16.gmra.mxu0 %v390
        %v537 = vpop.f32.mrf.mxu0
        %v538 = vadd.f32 %v284, %v537
        %v539 = vpop.f32.mrf.mxu0
        %v540 = vadd.f32 %v284, %v539
        %541 = vmatmul.bf16.gmra.mxu0 %v393
        %v542 = vpop.f32.mrf.mxu0
        %v543 = vadd.f32 %v284, %v542
        %v544 = vpop.f32.mrf.mxu0
        %v545 = vadd.f32 %v284, %v544
        %546 = vmatmul.bf16.gmra.mxu0 %v396
        %v547 = vpop.f32.mrf.mxu0
        %v548 = vadd.f32 %v284, %v547
        %v549 = vpop.f32.mrf.mxu0
        %v550 = vadd.f32 %v284, %v549
        %551 = vmatmul.bf16.gmra.mxu0 %v399
        %v552 = vpop.f32.mrf.mxu0
        %v553 = vadd.f32 %v284, %v552
        %v554 = vpop.f32.mrf.mxu0
        %v555 = vadd.f32 %v284, %v554
        %556 = vmatmul.bf16.gmra.mxu0 %v402
        %v557 = vpop.f32.mrf.mxu0
        %v558 = vadd.f32 %v284, %v557
        %v559 = vpop.f32.mrf.mxu0
        %v560 = vadd.f32 %v284, %v559
        %561 = vmatmul.bf16.gmra.mxu0 %v405
        %v562 = vpop.f32.mrf.mxu0
        %v563 = vadd.f32 %v284, %v562
        %v564 = vpop.f32.mrf.mxu0
        %v565 = vadd.f32 %v284, %v564
        %566 = vmatmul.bf16.gmra.mxu0 %v408
        %v567 = vpop.f32.mrf.mxu0
        %v568 = vadd.f32 %v284, %v567
        %v569 = vpop.f32.mrf.mxu0
        %v570 = vadd.f32 %v284, %v569
        %571 = vmatmul.bf16.gmra.mxu0 %v411
        %v572 = vpop.f32.mrf.mxu0
        %v573 = vadd.f32 %v284, %v572
        %v574 = vpop.f32.mrf.mxu0
        %v575 = vadd.f32 %v284, %v574
        %576 = vmatmul.bf16.gmra.mxu0 %v414
        %v577 = vpop.f32.mrf.mxu0
        %v578 = vadd.f32 %v284, %v577
        %v579 = vpop.f32.mrf.mxu0
        %v580 = vadd.f32 %v284, %v579
        %581 = vmatmul.bf16.gmra.mxu0 %v417
        %v582 = vpop.f32.mrf.mxu0
        %v583 = vadd.f32 %v284, %v582
        %v584 = vpop.f32.mrf.mxu0
        %v585 = vadd.f32 %v284, %v584
        %586 = vmatmul.bf16.gmra.mxu0 %v420
        %v587 = vpop.f32.mrf.mxu0
        %v588 = vadd.f32 %v284, %v587
        %v589 = vpop.f32.mrf.mxu0
        %v590 = vadd.f32 %v284, %v589
        %591 = vmatmul.bf16.gmra.mxu0 %v423
        %v592 = vpop.f32.mrf.mxu0
        %v593 = vadd.f32 %v284, %v592
        %v594 = vpop.f32.mrf.mxu0
        %v595 = vadd.f32 %v284, %v594
        %596 = vmatmul.bf16.gmra.mxu0 %v426
        %v597 = vpop.f32.mrf.mxu0
        %v598 = vadd.f32 %v284, %v597
        %v599 = vpop.f32.mrf.mxu0
        %v600 = vadd.f32 %v284, %v599
        %601 = vmatmul.bf16.gmra.mxu0 %v429
        %v602 = vpop.f32.mrf.mxu0
        %v603 = vadd.f32 %v284, %v602
        %v604 = vpop.f32.mrf.mxu0
        %v605 = vadd.f32 %v284, %v604
        %606 = vmatmul.bf16.gmra.mxu0 %v432
        %v607 = vpop.f32.mrf.mxu0
        %v608 = vadd.f32 %v284, %v607
        %v609 = vpop.f32.mrf.mxu0
        %v610 = vadd.f32 %v284, %v609
        %611 = vdwg.mxu0
        %612 = vmatpush.bf16.msra.mxu0 0
        %613 = vmatpush.bf16.msra.mxu0 0
        %614 = vmatpush.bf16.msra.mxu0 0
        %615 = vmatpush.bf16.msra.mxu0 0
        %616 = vmatpush.bf16.msra.mxu0 0
        %617 = vmatpush.bf16.msra.mxu0 0
        %618 = vmatpush.bf16.msra.mxu0 0
        %619 = vmatpush.bf16.msra.mxu0 %v381
        %620 = vmatmul.bf16.gmra.mxu0 %v387
        %v621 = vpop.f32.mrf.mxu0
        %v622 = vadd.f32 %v285, %v621
        %v623 = vpop.f32.mrf.mxu0
        %v624 = vadd.f32 %v285, %v623
        %625 = vmatmul.bf16.gmra.mxu0 %v390
        %v626 = vpop.f32.mrf.mxu0
        %v627 = vadd.f32 %v285, %v626
        %v628 = vpop.f32.mrf.mxu0
        %v629 = vadd.f32 %v285, %v628
        %630 = vmatmul.bf16.gmra.mxu0 %v393
        %v631 = vpop.f32.mrf.mxu0
        %v632 = vadd.f32 %v285, %v631
        %v633 = vpop.f32.mrf.mxu0
        %v634 = vadd.f32 %v285, %v633
        %635 = vmatmul.bf16.gmra.mxu0 %v396
        %v636 = vpop.f32.mrf.mxu0
        %v637 = vadd.f32 %v285, %v636
        %v638 = vpop.f32.mrf.mxu0
        %v639 = vadd.f32 %v285, %v638
        %640 = vmatmul.bf16.gmra.mxu0 %v399
        %v641 = vpop.f32.mrf.mxu0
        %v642 = vadd.f32 %v285, %v641
        %v643 = vpop.f32.mrf.mxu0
        %v644 = vadd.f32 %v285, %v643
        %645 = vmatmul.bf16.gmra.mxu0 %v402
        %v646 = vpop.f32.mrf.mxu0
        %v647 = vadd.f32 %v285, %v646
        %v648 = vpop.f32.mrf.mxu0
        %v649 = vadd.f32 %v285, %v648
        %650 = vmatmul.bf16.gmra.mxu0 %v405
        %v651 = vpop.f32.mrf.mxu0
        %v652 = vadd.f32 %v285, %v651
        %v653 = vpop.f32.mrf.mxu0
        %v654 = vadd.f32 %v285, %v653
        %655 = vmatmul.bf16.gmra.mxu0 %v408
        %v656 = vpop.f32.mrf.mxu0
        %v657 = vadd.f32 %v285, %v656
        %v658 = vpop.f32.mrf.mxu0
        %v659 = vadd.f32 %v285, %v658
        %660 = vmatmul.bf16.gmra.mxu0 %v411
        %v661 = vpop.f32.mrf.mxu0
        %v662 = vadd.f32 %v285, %v661
        %v663 = vpop.f32.mrf.mxu0
        %v664 = vadd.f32 %v285, %v663
        %665 = vmatmul.bf16.gmra.mxu0 %v414
        %v666 = vpop.f32.mrf.mxu0
        %v667 = vadd.f32 %v285, %v666
        %v668 = vpop.f32.mrf.mxu0
        %v669 = vadd.f32 %v285, %v668
        %670 = vmatmul.bf16.gmra.mxu0 %v417
        %v671 = vpop.f32.mrf.mxu0
        %v672 = vadd.f32 %v285, %v671
        %v673 = vpop.f32.mrf.mxu0
        %v674 = vadd.f32 %v285, %v673
        %675 = vmatmul.bf16.gmra.mxu0 %v420
        %v676 = vpop.f32.mrf.mxu0
        %v677 = vadd.f32 %v285, %v676
        %v678 = vpop.f32.mrf.mxu0
        %v679 = vadd.f32 %v285, %v678
        %680 = vmatmul.bf16.gmra.mxu0 %v423
        %v681 = vpop.f32.mrf.mxu0
        %v682 = vadd.f32 %v285, %v681
        %v683 = vpop.f32.mrf.mxu0
        %v684 = vadd.f32 %v285, %v683
        %685 = vmatmul.bf16.gmra.mxu0 %v426
        %v686 = vpop.f32.mrf.mxu0
        %v687 = vadd.f32 %v285, %v686
        %v688 = vpop.f32.mrf.mxu0
        %v689 = vadd.f32 %v285, %v688
        %690 = vmatmul.bf16.gmra.mxu0 %v429
        %v691 = vpop.f32.mrf.mxu0
        %v692 = vadd.f32 %v285, %v691
        %v693 = vpop.f32.mrf.mxu0
        %v694 = vadd.f32 %v285, %v693
        %695 = vmatmul.bf16.gmra.mxu0 %v432
        %v696 = vpop.f32.mrf.mxu0
        %v697 = vadd.f32 %v285, %v696
        %v698 = vpop.f32.mrf.mxu0
        %v699 = vadd.f32 %v285, %v698
        %700 = vdwg.mxu0
        %701 = vst [vmem:[%s241] sm:$0xff] %v444
        %702 = vst [vmem:[%s241 + $0x8] sm:$0xff] %v533
        %703 = vst [vmem:[%s241 + $0x10] sm:$0xff] %v622
        %704 = vst [vmem:[%s241 + $0x18] sm:$0xff] %v446
        %705 = vst [vmem:[%s241 + $0x20] sm:$0xff] %v535
        %706 = vst [vmem:[%s241 + $0x28] sm:$0xff] %v624
        %707 = vst [vmem:[%s241 + $0x30] sm:$0xff] %v449
        %708 = vst [vmem:[%s241 + $0x38] sm:$0xff] %v538
        %709 = vst [vmem:[%s241 + $0x40] sm:$0xff] %v627
        %710 = vst [vmem:[%s241 + $0x48] sm:$0xff] %v451
        %711 = vst [vmem:[%s241 + $0x50] sm:$0xff] %v540
        %712 = vst [vmem:[%s241 + $0x58] sm:$0xff] %v629
        %713 = vst [vmem:[%s241 + $0x60] sm:$0xff] %v454
        %714 = vst [vmem:[%s241 + $0x68] sm:$0xff] %v543
        %715 = vst [vmem:[%s241 + $0x70] sm:$0xff] %v632
        %716 = vst [vmem:[%s241 + $0x78] sm:$0xff] %v456
        %717 = vst [vmem:[%s241 + $0x80] sm:$0xff] %v545
        %718 = vst [vmem:[%s241 + $0x88] sm:$0xff] %v634
        %719 = vst [vmem:[%s241 + $0x90] sm:$0xff] %v459
        %720 = vst [vmem:[%s241 + $0x98] sm:$0xff] %v548
        %721 = vst [vmem:[%s241 + $0xa0] sm:$0xff] %v637
        %722 = vst [vmem:[%s241 + $0xa8] sm:$0xff] %v461
        %723 = vst [vmem:[%s241 + $0xb0] sm:$0xff] %v550
        %724 = vst [vmem:[%s241 + $0xb8] sm:$0xff] %v639
        %725 = vst [vmem:[%s241 + $0xc0] sm:$0xff] %v464
        %726 = vst [vmem:[%s241 + $0xc8] sm:$0xff] %v553
        %727 = vst [vmem:[%s241 + $0xd0] sm:$0xff] %v642
        %728 = vst [vmem:[%s241 + $0xd8] sm:$0xff] %v466
        %729 = vst [vmem:[%s241 + $0xe0] sm:$0xff] %v555
        %730 = vst [vmem:[%s241 + $0xe8] sm:$0xff] %v644
        %731 = vst [vmem:[%s241 + $0xf0] sm:$0xff] %v469
        %732 = vst [vmem:[%s241 + $0xf8] sm:$0xff] %v558
        %733 = vst [vmem:[%s241 + $0x100] sm:$0xff] %v647
        %734 = vst [vmem:[%s241 + $0x108] sm:$0xff] %v471
        %735 = vst [vmem:[%s241 + $0x110] sm:$0xff] %v560
        %736 = vst [vmem:[%s241 + $0x118] sm:$0xff] %v649
        %737 = vst [vmem:[%s241 + $0x120] sm:$0xff] %v474
        %738 = vst [vmem:[%s241 + $0x128] sm:$0xff] %v563
        %739 = vst [vmem:[%s241 + $0x130] sm:$0xff] %v652
        %740 = vst [vmem:[%s241 + $0x138] sm:$0xff] %v476
        %741 = vst [vmem:[%s241 + $0x140] sm:$0xff] %v565
        %742 = vst [vmem:[%s241 + $0x148] sm:$0xff] %v654
        %743 = vst [vmem:[%s241 + $0x150] sm:$0xff] %v479
        %744 = vst [vmem:[%s241 + $0x158] sm:$0xff] %v568
        %745 = vst [vmem:[%s241 + $0x160] sm:$0xff] %v657
        %746 = vst [vmem:[%s241 + $0x168] sm:$0xff] %v481
        %747 = vst [vmem:[%s241 + $0x170] sm:$0xff] %v570
        %748 = vst [vmem:[%s241 + $0x178] sm:$0xff] %v659
        %749 = vst [vmem:[%s241 + $0x180] sm:$0xff] %v484
        %750 = vst [vmem:[%s241 + $0x188] sm:$0xff] %v573
        %751 = vst [vmem:[%s241 + $0x190] sm:$0xff] %v662
        %752 = vst [vmem:[%s241 + $0x198] sm:$0xff] %v486
        %753 = vst [vmem:[%s241 + $0x1a0] sm:$0xff] %v575
        %754 = vst [vmem:[%s241 + $0x1a8] sm:$0xff] %v664
        %755 = vst [vmem:[%s241 + $0x1b0] sm:$0xff] %v489
        %756 = vst [vmem:[%s241 + $0x1b8] sm:$0xff] %v578
        %757 = vst [vmem:[%s241 + $0x1c0] sm:$0xff] %v667
        %758 = vst [vmem:[%s241 + $0x1c8] sm:$0xff] %v491
        %759 = vst [vmem:[%s241 + $0x1d0] sm:$0xff] %v580
        %760 = vst [vmem:[%s241 + $0x1d8] sm:$0xff] %v669
        %761 = vst [vmem:[%s241 + $0x1e0] sm:$0xff] %v494
        %762 = vst [vmem:[%s241 + $0x1e8] sm:$0xff] %v583
        %763 = vst [vmem:[%s241 + $0x1f0] sm:$0xff] %v672
        %764 = vst [vmem:[%s241 + $0x1f8] sm:$0xff] %v496
        %765 = vst [vmem:[%s241 + $0x200] sm:$0xff] %v585
        %766 = vst [vmem:[%s241 + $0x208] sm:$0xff] %v674
        %767 = vst [vmem:[%s241 + $0x210] sm:$0xff] %v499
        %768 = vst [vmem:[%s241 + $0x218] sm:$0xff] %v588
        %769 = vst [vmem:[%s241 + $0x220] sm:$0xff] %v677
        %770 = vst [vmem:[%s241 + $0x228] sm:$0xff] %v501
        %771 = vst [vmem:[%s241 + $0x230] sm:$0xff] %v590
        %772 = vst [vmem:[%s241 + $0x238] sm:$0xff] %v679
        %773 = vst [vmem:[%s241 + $0x240] sm:$0xff] %v504
        %774 = vst [vmem:[%s241 + $0x248] sm:$0xff] %v593
        %775 = vst [vmem:[%s241 + $0x250] sm:$0xff] %v682
        %776 = vst [vmem:[%s241 + $0x258] sm:$0xff] %v506
        %777 = vst [vmem:[%s241 + $0x260] sm:$0xff] %v595
        %778 = vst [vmem:[%s241 + $0x268] sm:$0xff] %v684
        %779 = vst [vmem:[%s241 + $0x270] sm:$0xff] %v509
        %780 = vst [vmem:[%s241 + $0x278] sm:$0xff] %v598
        %781 = vst [vmem:[%s241 + $0x280] sm:$0xff] %v687
        %782 = vst [vmem:[%s241 + $0x288] sm:$0xff] %v511
        %783 = vst [vmem:[%s241 + $0x290] sm:$0xff] %v600
        %784 = vst [vmem:[%s241 + $0x298] sm:$0xff] %v689
        %785 = vst [vmem:[%s241 + $0x2a0] sm:$0xff] %v514
        %786 = vst [vmem:[%s241 + $0x2a8] sm:$0xff] %v603
        %787 = vst [vmem:[%s241 + $0x2b0] sm:$0xff] %v692
        %788 = vst [vmem:[%s241 + $0x2b8] sm:$0xff] %v516
        %789 = vst [vmem:[%s241 + $0x2c0] sm:$0xff] %v605
        %790 = vst [vmem:[%s241 + $0x2c8] sm:$0xff] %v694
        %791 = vst [vmem:[%s241 + $0x2d0] sm:$0xff] %v519
        %792 = vst [vmem:[%s241 + $0x2d8] sm:$0xff] %v608
        %793 = vst [vmem:[%s241 + $0x2e0] sm:$0xff] %v697
        %794 = vst [vmem:[%s241 + $0x2e8] sm:$0xff] %v521
        %795 = vst [vmem:[%s241 + $0x2f0] sm:$0xff] %v610
        %796 = vst [vmem:[%s241 + $0x2f8] sm:$0xff] %v699
        %s797 = smul.u32 32, %s19
        %s798 = smul.u32 3, %s20
        %p799 = scmp.lt.s32.totalorder %s797, 255
        %s800 = scalar_select %p799, %s797, 255
        %p801 = scmp.lt.s32.totalorder %s798, 2
        %s802 = scalar_select %p801, %s798, 2
        %s803 = smul.addr %s800, 3
        %s804 = sadd.s32 %s802, %s803
        %s805 = smul.addr %s804, 8
        %s806 = scalar_lea.vmem %s3, %s805
        // Predicated region
        $region37: #{resize_and_normalize.3} parent=31 // pred_check
          %p807 = pneg %p125
        $region38: #{resize_and_normalize.3} parent=31 // pred_check_branch
          %809 = sbr.rel (%p807) target = $region40
        $region39: #{resize_and_normalize.3} parent=31 // pred_region
          %s810 = smul.u32 32, %s19
          %s811 = smul.u32 3, %s20
        $region40: #{resize_and_normalize.3} parent=31 // pred_fallthru
          _
      $region32: #{resize_and_normalize.3} parent=5 // pred_fallthru
        _
      %p812 = scmp.le.s32.totalorder 2, %s10
      // Predicated region
      $region41: #{resize_and_normalize.3} parent=5 // pred_check
        %p813 = pneg %p812
      $region42: #{resize_and_normalize.3} parent=5 // pred_check_branch
        %815 = sbr.rel (%p813) target = $region44
      $region43: #{resize_and_normalize.3} parent=5 // pred_region
        %s816 = ssub.s32 %s10, 2
        // Predicated region
        $region45: #{resize_and_normalize.3} parent=43 // pred_check
          %p817 = pneg %p131
        $region46: #{resize_and_normalize.3} parent=43 // pred_check_branch
          %819 = sbr.rel (%p817) target = $region48
        $region47: #{resize_and_normalize.3} parent=43 // pred_region
          %s820 = smul.u32 32, %s21
          %s821 = smul.u32 3, %s22
          %p822 = scmp.lt.s32.totalorder %s820, 255
          %s823 = scalar_select %p822, %s820, 255
          %p824 = scmp.lt.s32.totalorder %s821, 2
          %s825 = scalar_select %p824, %s821, 2
          %s826 = smul.addr %s823, 3
          %s827 = sadd.s32 %s825, %s826
          %s828 = smul.addr %s827, 8
          %s829 = scalar_lea.vmem %s3, %s828
        $region48: #{resize_and_normalize.3} parent=43 // pred_fallthru
          _
      $region44: #{resize_and_normalize.3} parent=5 // pred_fallthru
        _
    $region6: #{resize_and_normalize.3} parent=1 // loop_footer
      %s14 = sadd.s32 1, %s10
    $region7: #{resize_and_normalize.3} parent=1 // loop_footer_branch
      %9 = sbr.rel target = $region3
    $region8: #{resize_and_normalize.3} parent=1 // loop_exit
      _
    %830 = vsyncpa [#allocation3], 1
    %s831 = scalar_lea.sflag [#allocation3], 1
    %832 = vsyncpa %s831, 1

</llo_original>
